<compile_context>
chip_gen: v5e
topology: v5e:2x2
jax: 0.10.0
libtpu: 0.0.40
codegen_flags: <defaults>
</compile_context>

<pallas_src>
import functools

import jax
import jax.numpy as jnp
from jax.experimental import pallas as pl
from jax.experimental.pallas import tpu as pltpu

NUM_HEADS = 8


# ------------------- Kernel 1: fused, transposed QKV 1x1-conv projection ----
def qkv_kernel(x_ref, w_ref, b_ref, o_ref):
    # x_ref : (C, N*T)   w_ref : (3C, C)   b_ref : (3C, 1)   o_ref : (3C, N*T)
    o_ref[...] = (
        jnp.dot(w_ref[...], x_ref[...], preferred_element_type=jnp.float32)
        + b_ref[...]
    )


def qkv_proj(x_t, w3t, b3):
    B, C, NT = x_t.shape
    C3 = w3t.shape[0]
    return pl.pallas_call(
        qkv_kernel,
        grid=(B,),
        in_specs=[
            pl.BlockSpec((None, C, NT), lambda b: (b, 0, 0)),
            pl.BlockSpec((C3, C), lambda b: (0, 0)),
            pl.BlockSpec((C3, 1), lambda b: (0, 0)),
        ],
        out_specs=pl.BlockSpec((None, C3, NT), lambda b: (b, 0, 0)),
        out_shape=jax.ShapeDtypeStruct((B, C3, NT), jnp.float32),
        compiler_params=pltpu.CompilerParams(dimension_semantics=("parallel",)),
    )(x_t, w3t, b3)


# ------------------- Kernel 2: all-heads attention, one step per batch ------
def attn_kernel(qkv_ref, o_ref, *, C, scale):
    qkv = qkv_ref[...]                       # (3C, N, T)
    q = qkv[0:C]                             # (C, N, T)
    k = qkv[C:2 * C]
    v = qkv[2 * C:3 * C]
    # channel axis == head axis (c = chunk*num_heads + h) acts as the einsum batch dim
    s = jnp.einsum('cnt,cmt->cnm', q, k,
                   preferred_element_type=jnp.float32) * scale        # (C, N, N)
    s = s - jnp.max(s, axis=-1, keepdims=True)
    p = jnp.exp(s)
    denom = jnp.sum(p, axis=-1, keepdims=True)                        # (C, N, 1)
    o = jnp.einsum('cnm,cmt->cnt', p, v,
                   preferred_element_type=jnp.float32)                # (C, N, T)
    # Exact divide (not approx reciprocal): negligible cost at this size, keeps the
    # kernel within f32 rounding of the PyTorch softmax.
    o_ref[...] = o / denom


def attention(qkv, C, dph):
    B, C3, N, T = qkv.shape
    scale = 1.0 / (dph ** 0.5)
    return pl.pallas_call(
        functools.partial(attn_kernel, C=C, scale=scale),
        grid=(B,),
        in_specs=[pl.BlockSpec((None, C3, N, T), lambda b: (b, 0, 0, 0))],
        out_specs=pl.BlockSpec((None, C, N, T), lambda b: (b, 0, 0, 0)),
        out_shape=jax.ShapeDtypeStruct((B, C, N, T), jnp.float32),
        compiler_params=pltpu.CompilerParams(dimension_semantics=("parallel",)),
    )(qkv)


# ------------------- full forward pass ---------------------------------------
@functools.partial(jax.jit, static_argnames="batch_size")
def temporal_attention(x, wq, wk, wv, bq, bk, bv, batch_size):
    B, N, T, C = x.shape
    if batch_size != B:
        raise ValueError(f"batch_size ({batch_size}) must equal x.shape[0] ({B})")
    NT = N * T
    # torch: x.permute(0, 3, 1, 2) -> (B, C, N, T); flatten spatial for lane-dense IO.
    x_t = jnp.transpose(x, (0, 3, 1, 2)).reshape(B, C, NT)
    # Fused QKV weight stored transposed: row r is output channel r of [q|k|v].
    w3t = jnp.concatenate([wq.T, wk.T, wv.T], axis=0)             # (3C, C)
    b3 = jnp.concatenate([bq, bk, bv], axis=0).reshape(3 * C, 1)  # (3C, 1)

    qkv = qkv_proj(x_t, w3t, b3)                                  # (B, 3C, N*T)
    qkv = qkv.reshape(B, 3 * C, N, T)                             # free metadata reshape
    out = attention(qkv, C, C // NUM_HEADS)                       # (B, C, N, T)
    # Dropout(p=0.3): identity in eval mode (forward-semantics reproduction).
    # TODO(synk): training-mode dropout via pltpu.prng_seed + pltpu.stateful_bernoulli.
    return out


# ------------------- pure-JAX reference (mirrors torch forward literally) ----
def reference(x, wq, wk, wv, bq, bk, bv, batch_size):
    B, N, T, C = x.shape
    nh = NUM_HEADS
    dph = C // nh
    hp = jax.lax.Precision.HIGHEST                                # true-f32 ground truth
    x_nchw = jnp.transpose(x, (0, 3, 1, 2))                       # (B, C, N, T)

    def conv(w, b):                                               # 1x1 conv in NCHW
        return (jnp.einsum('bcnt,co->bont', x_nchw, w, precision=hp)
                + b[None, :, None, None])

    def regroup(t):   # torch.cat(torch.split(t, num_heads, dim=1), dim=0)
        return jnp.concatenate(jnp.split(t, dph, axis=1), axis=0)

    q = regroup(conv(wq, bq))
    k = regroup(conv(wk, bk))
    v = regroup(conv(wv, bv))
    s = jnp.einsum('ghnt,ghmt->ghnm', q, k, precision=hp) / (dph ** 0.5)
    p = jax.nn.softmax(s, axis=-1)
    o = jnp.einsum('ghnm,ghmt->ghnt', p, v, precision=hp)
    # torch.cat(torch.split(o, batch_size, dim=0), dim=1)
    return jnp.concatenate(jnp.split(o, dph, axis=0), axis=1)


if __name__ == "__main__":
    B, N, T, C = 2, 8, 16, 16          # in_channels=16, num_heads=8, dim_per_head=2
    key = jax.random.PRNGKey(0)
    ks = jax.random.split(key, 7)
    x = jax.random.normal(ks[0], (B, N, T, C), jnp.float32)

    # Deterministic Conv2d-style init; weights stored as (C_in, C_out) for x @ W.
    bound = 1.0 / (C ** 0.5)
    wq = jax.random.uniform(ks[1], (C, C), jnp.float32, -bound, bound)
    wk = jax.random.uniform(ks[2], (C, C), jnp.float32, -bound, bound)
    wv = jax.random.uniform(ks[3], (C, C), jnp.float32, -bound, bound)
    bq = jax.random.uniform(ks[4], (C,), jnp.float32, -bound, bound)
    bk = jax.random.uniform(ks[5], (C,), jnp.float32, -bound, bound)
    bv = jax.random.uniform(ks[6], (C,), jnp.float32, -bound, bound)

    out = temporal_attention(x, wq, wk, wv, bq, bk, bv, batch_size=B)
    out = jax.block_until_ready(out)

    ref = reference(x, wq, wk, wv, bq, bk, bv, B)
    assert out.shape == (B, C, N, T), out.shape
    # DEFAULT-precision f32 dots (MXU bf16 passes; same for interpret-mode XLA dots)
    # vs. the HIGHEST-precision reference leave an O(1e-3..1e-2) gap after the softmax
    # amplifies logit rounding.  2e-2 bounds that with margin while staying ~10x below
    # any semantic error (wrong scale / regroup / bias all give >= 1e-1).
    err = float(jnp.max(jnp.abs(out - ref)))
    assert jnp.allclose(out, ref, atol=2e-2, rtol=2e-2), err
    print("KERNEL_OK")
</pallas_src>

<mosaic_0001>
module attributes {stable_mosaic.version = 11 : i64} {
  func.func @qkv_kernel(%arg0: i32, %arg1: memref<1x16x128xf32, #tpu.memory_space<vmem>>, %arg2: memref<48x16xf32, #tpu.memory_space<vmem>>, %arg3: memref<48x1xf32, #tpu.memory_space<vmem>>, %arg4: memref<1x48x128xf32, #tpu.memory_space<vmem>>) attributes {dimension_semantics = [#tpu.dimension_semantics<parallel>], iteration_bounds = array<i64: 2>, scalar_prefetch = 0 : i64, scratch_operands = 0 : i64, tpu.core_type = #tpu.core_type<tc>, window_params = [{transform_indices = @transform_0, window_bounds = array<i64: 1, 16, 128>}, {pipeline_mode = #tpu.pipeline_mode<synchronous>, transform_indices = @transform_1, window_bounds = array<i64: 48, 16>}, {pipeline_mode = #tpu.pipeline_mode<synchronous>, transform_indices = @transform_2, window_bounds = array<i64: 48, 1>}, {transform_indices = @transform_3, window_bounds = array<i64: 1, 48, 128>}]} {
    %c0 = arith.constant 0 : index
    %c0_0 = arith.constant 0 : index
    %0 = vector.load %arg2[%c0, %c0_0] : memref<48x16xf32, #tpu.memory_space<vmem>>, vector<48x16xf32>
    %c0_1 = arith.constant 0 : index
    %c0_2 = arith.constant 0 : index
    %c0_3 = arith.constant 0 : index
    %1 = vector.load %arg1[%c0_1, %c0_2, %c0_3] : memref<1x16x128xf32, #tpu.memory_space<vmem>>, vector<1x16x128xf32>
    %2 = vector.shape_cast %1 : vector<1x16x128xf32> to vector<16x128xf32>
    %cst = arith.constant dense<0.000000e+00> : vector<48x128xf32>
    %3 = tpu.matmul %0, %2, %cst {dimension_numbers = #tpu.dot_dimension_numbers<[1], [0], [0], [1], [0, 0, 1, 1], [], []>} : vector<48x16xf32>, vector<16x128xf32>, vector<48x128xf32> -> vector<48x128xf32>
    %c0_4 = arith.constant 0 : index
    %c0_5 = arith.constant 0 : index
    %4 = vector.load %arg3[%c0_4, %c0_5] : memref<48x1xf32, #tpu.memory_space<vmem>>, vector<48x1xf32>
    %5 = vector.broadcast %4 : vector<48x1xf32> to vector<48x128xf32>
    %6 = arith.addf %3, %5 : vector<48x128xf32>
    %c0_6 = arith.constant 0 : index
    %c0_7 = arith.constant 0 : index
    %c0_8 = arith.constant 0 : index
    %7 = vector.load %arg4[%c0_6, %c0_7, %c0_8] : memref<1x48x128xf32, #tpu.memory_space<vmem>>, vector<1x48x128xf32>
    %8 = vector.shape_cast %7 : vector<1x48x128xf32> to vector<48x128xf32>
    %9 = vector.shape_cast %6 : vector<48x128xf32> to vector<1x48x128xf32>
    tpu.vector_store %arg4[%c0_6, %c0_7, %c0_8], %9 {strides = array<i32>} : memref<1x48x128xf32, #tpu.memory_space<vmem>>, vector<1x48x128xf32>,
    return
  }
  func.func @transform_0(%arg0: i32) -> (i32, i32, i32) {
    %c0_i32 = arith.constant 0 : i32
    %c0_i32_0 = arith.constant 0 : i32
    %c0_i32_1 = arith.constant 0 : i32
    return %arg0, %c0_i32, %c0_i32_0 : i32, i32, i32
  }
  func.func @transform_1(%arg0: i32) -> (i32, i32) {
    %c0_i32 = arith.constant 0 : i32
    %c0_i32_0 = arith.constant 0 : i32
    %c0_i32_1 = arith.constant 0 : i32
    return %c0_i32, %c0_i32_0 : i32, i32
  }
  func.func @transform_2(%arg0: i32) -> (i32, i32) {
    %c0_i32 = arith.constant 0 : i32
    %c0_i32_0 = arith.constant 0 : i32
    %c0_i32_1 = arith.constant 0 : i32
    return %c0_i32, %c0_i32_0 : i32, i32
  }
  func.func @transform_3(%arg0: i32) -> (i32, i32, i32) {
    %c0_i32 = arith.constant 0 : i32
    %c0_i32_0 = arith.constant 0 : i32
    %c0_i32_1 = arith.constant 0 : i32
    return %arg0, %c0_i32, %c0_i32_0 : i32, i32, i32
  }
}

module attributes {stable_mosaic.version = 11 : i64} {
  func.func @attn_kernel(%arg0: i32, %arg1: memref<1x48x8x16xf32, #tpu.memory_space<vmem>>, %arg2: memref<1x16x8x16xf32, #tpu.memory_space<vmem>>) attributes {dimension_semantics = [#tpu.dimension_semantics<parallel>], iteration_bounds = array<i64: 2>, scalar_prefetch = 0 : i64, scratch_operands = 0 : i64, tpu.core_type = #tpu.core_type<tc>, window_params = [{transform_indices = @transform_0, window_bounds = array<i64: 1, 48, 8, 16>}, {transform_indices = @transform_1, window_bounds = array<i64: 1, 16, 8, 16>}]} {
    %c0 = arith.constant 0 : index
    %c0_0 = arith.constant 0 : index
    %c0_1 = arith.constant 0 : index
    %c0_2 = arith.constant 0 : index
    %0 = vector.load %arg1[%c0, %c0_0, %c0_1, %c0_2] : memref<1x48x8x16xf32, #tpu.memory_space<vmem>>, vector<1x48x8x16xf32>
    %1 = vector.shape_cast %0 : vector<1x48x8x16xf32> to vector<48x8x16xf32>
    %2 = vector.extract_strided_slice %1 {offsets = [0, 0, 0], sizes = [16, 8, 16], strides = [1, 1, 1]} : vector<48x8x16xf32> to vector<16x8x16xf32>
    %3 = vector.extract_strided_slice %1 {offsets = [16, 0, 0], sizes = [16, 8, 16], strides = [1, 1, 1]} : vector<48x8x16xf32> to vector<16x8x16xf32>
    %4 = vector.extract_strided_slice %1 {offsets = [32, 0, 0], sizes = [16, 8, 16], strides = [1, 1, 1]} : vector<48x8x16xf32> to vector<16x8x16xf32>
    "tpu.trace_start"() <{level = 10 : i32, message = "cnt,cmt->cnm"}> : () -> ()
    %cst = arith.constant dense<0.000000e+00> : vector<16x8x8xf32>
    %5 = tpu.matmul %2, %3, %cst {dimension_numbers = #tpu.dot_dimension_numbers<[2], [2], [1], [1], [0, 0, 0, 1, 1, 1], [0], [0]>} : vector<16x8x16xf32>, vector<16x8x16xf32>, vector<16x8x8xf32> -> vector<16x8x8xf32>
    "tpu.trace_stop"() : () -> ()
    %cst_3 = arith.constant 0.707106769 : f32
    %6 = vector.broadcast %cst_3 : f32 to vector<16x8x8xf32>
    %7 = arith.mulf %5, %6 : vector<16x8x8xf32>
    %cst_4 = arith.constant dense<0xFF800000> : vector<16x8xf32>
    %8 = vector.multi_reduction <maximumf>, %7, %cst_4 [2] : vector<16x8x8xf32> to vector<16x8xf32>
    %9 = vector.shape_cast %8 : vector<16x8xf32> to vector<16x8x1xf32>
    %10 = vector.broadcast %9 : vector<16x8x1xf32> to vector<16x8x8xf32>
    %11 = arith.subf %7, %10 : vector<16x8x8xf32>
    %12 = math.exp %11 : vector<16x8x8xf32>
    %cst_5 = arith.constant dense<0.000000e+00> : vector<16x8xf32>
    %13 = vector.multi_reduction <add>, %12, %cst_5 [2] : vector<16x8x8xf32> to vector<16x8xf32>
    %14 = vector.shape_cast %13 : vector<16x8xf32> to vector<16x8x1xf32>
    "tpu.trace_start"() <{level = 10 : i32, message = "cnm,cmt->cnt"}> : () -> ()
    %cst_6 = arith.constant dense<0.000000e+00> : vector<16x8x16xf32>
    %15 = tpu.matmul %12, %4, %cst_6 {dimension_numbers = #tpu.dot_dimension_numbers<[2], [1], [1], [2], [0, 0, 0, 1, 1, 2], [0], [0]>} : vector<16x8x8xf32>, vector<16x8x16xf32>, vector<16x8x16xf32> -> vector<16x8x16xf32>
    "tpu.trace_stop"() : () -> ()
    %16 = vector.broadcast %14 : vector<16x8x1xf32> to vector<16x8x16xf32>
    %17 = arith.divf %15, %16 : vector<16x8x16xf32>
    %c0_7 = arith.constant 0 : index
    %c0_8 = arith.constant 0 : index
    %c0_9 = arith.constant 0 : index
    %c0_10 = arith.constant 0 : index
    %18 = vector.load %arg2[%c0_7, %c0_8, %c0_9, %c0_10] : memref<1x16x8x16xf32, #tpu.memory_space<vmem>>, vector<1x16x8x16xf32>
    %19 = vector.shape_cast %18 : vector<1x16x8x16xf32> to vector<16x8x16xf32>
    %20 = vector.shape_cast %17 : vector<16x8x16xf32> to vector<1x16x8x16xf32>
    tpu.vector_store %arg2[%c0_7, %c0_8, %c0_9, %c0_10], %20 {strides = array<i32>} : memref<1x16x8x16xf32, #tpu.memory_space<vmem>>, vector<1x16x8x16xf32>,
    return
  }
  func.func @transform_0(%arg0: i32) -> (i32, i32, i32, i32) {
    %c0_i32 = arith.constant 0 : i32
    %c0_i32_0 = arith.constant 0 : i32
    %c0_i32_1 = arith.constant 0 : i32
    %c0_i32_2 = arith.constant 0 : i32
    return %arg0, %c0_i32, %c0_i32_0, %c0_i32_1 : i32, i32, i32, i32
  }
  func.func @transform_1(%arg0: i32) -> (i32, i32, i32, i32) {
    %c0_i32 = arith.constant 0 : i32
    %c0_i32_0 = arith.constant 0 : i32
    %c0_i32_1 = arith.constant 0 : i32
    %c0_i32_2 = arith.constant 0 : i32
    return %arg0, %c0_i32, %c0_i32_0, %c0_i32_1 : i32, i32, i32, i32
  }
}

</mosaic_0001>

<llo_original>
// kernel: temporal_attention.2
$region0: #{temporal_attention.2}
  #allocation0 [shape = 'u32[]', space=smem, size = 0x4, offset = 0x4, fixed_abs, tag = 'smem constant byte address 0x4 - core index']
  #allocation1 [shape = 'u32[72,128]{1,0:T(1,128)}', space=vmem, size = 0x9000, scoped, tag = 'internal scratch']
  %s0 = inlined_call_operand.vmem [shape: f32[2,16,128], index: 0, kind: input, shape index: {}]
  %s1 = inlined_call_operand.vmem [shape: f32[48,16], index: 1, kind: input, shape index: {}]
  %s2 = inlined_call_operand.vmem [shape: f32[48,1], index: 2, kind: input, shape index: {}]
  %s3 = inlined_call_operand.vmem [shape: f32[2,48,128], index: 3, kind: output, shape index: {}]
  %s4 = sld [smem:[#allocation0]]
  $region45: #{temporal_attention.2} parent=0
    _
  %s6 = ssub.s32 1, %s4
  %s7 = scalar_select 0, %s6, %s4
  loop: start=0, step=1, limit=4
  $region2: #{temporal_attention.2} parent=0 // loop_pre_header
    _
  $region3: #{temporal_attention.2} parent=0 // loop_header
    %s9 = sphi 0, %s13
    %p10 = scmp.ge.s32.totalorder %s9, 4
    %s19 = sphi 0, %s21
    %s22 = sphi 0, %s19
    %s23 = sphi 0, %s22
    %s39 = sphi 0, %s23
    %s43 = sphi 0, %s43
    %s45 = sphi 0, %s43
    %s46 = sphi 0, %s45
    %s60 = sphi 0, %s46
    %s64 = sphi 0, %s64
    %s66 = sphi 0, %s64
    %s67 = sphi 0, %s66
    %s81 = sphi 0, %s67
    %s87 = sphi 0, %s89
    %s90 = sphi 0, %s87
    %s91 = sphi 0, %s90
    %s107 = sphi 0, %s91
  $region4: #{temporal_attention.2} parent=0 // loop_header_branch
    %12 = sbr.rel (%p10) target = $region8
  $region5: #{temporal_attention.2} parent=0 // loop_body
    %s14 = ssub.s32 %s9, 1
    %s15 = ssub.s32 %s9, 2
    %s16 = sadd.s32 %s9, 1
    %s17 = ssub.s32 %s9, %s16
    %p18 = scmp.eq.s32.totalorder %s17, 0
    %s20 = sadd.s32 %s19, 1
    %s21 = scalar_select %p18, %s19, %s20
    %p24 = pneg %p18
    %p25 = scmp.eq.s32.totalorder %s9, 1
    %p26 = por %p24, %p25
    %p27 = scmp.ne.s32.totalorder %s19, %s22
    %p28 = scmp.eq.s32.totalorder %s9, 0
    %p29 = por %p27, %p28
    %p30 = scmp.ne.s32.totalorder %s19, %s22
    %p31 = scmp.eq.s32.totalorder %s14, 1
    %p32 = por %p30, %p31
    %p33 = scmp.ne.s32.totalorder %s22, %s23
    %p34 = scmp.eq.s32.totalorder %s14, 0
    %p35 = por %p33, %p34
    %p36 = scmp.ne.s32.totalorder %s22, %s23
    %p37 = scmp.eq.s32.totalorder %s15, 1
    %p38 = por %p36, %p37
    %p40 = scmp.ne.s32.totalorder %s23, %s39
    %p41 = scmp.eq.s32.totalorder %s15, 0
    %p42 = por %p40, %p41
    %s44 = sadd.s32 %s43, 1
    %p47 = scmp.eq.s32.totalorder %s9, 1
    %p48 = scmp.ne.s32.totalorder %s43, %s45
    %p49 = scmp.eq.s32.totalorder %s9, 0
    %p50 = por %p48, %p49
    %p51 = scmp.ne.s32.totalorder %s43, %s45
    %p52 = scmp.eq.s32.totalorder %s14, 1
    %p53 = por %p51, %p52
    %p54 = scmp.ne.s32.totalorder %s45, %s46
    %p55 = scmp.eq.s32.totalorder %s14, 0
    %p56 = por %p54, %p55
    %p57 = scmp.ne.s32.totalorder %s45, %s46
    %p58 = scmp.eq.s32.totalorder %s15, 1
    %p59 = por %p57, %p58
    %p61 = scmp.ne.s32.totalorder %s46, %s60
    %p62 = scmp.eq.s32.totalorder %s15, 0
    %p63 = por %p61, %p62
    %s65 = sadd.s32 %s64, 1
    %p68 = scmp.eq.s32.totalorder %s9, 1
    %p69 = scmp.ne.s32.totalorder %s64, %s66
    %p70 = scmp.eq.s32.totalorder %s9, 0
    %p71 = por %p69, %p70
    %p72 = scmp.ne.s32.totalorder %s64, %s66
    %p73 = scmp.eq.s32.totalorder %s14, 1
    %p74 = por %p72, %p73
    %p75 = scmp.ne.s32.totalorder %s66, %s67
    %p76 = scmp.eq.s32.totalorder %s14, 0
    %p77 = por %p75, %p76
    %p78 = scmp.ne.s32.totalorder %s66, %s67
    %p79 = scmp.eq.s32.totalorder %s15, 1
    %p80 = por %p78, %p79
    %p82 = scmp.ne.s32.totalorder %s67, %s81
    %p83 = scmp.eq.s32.totalorder %s15, 0
    %p84 = por %p82, %p83
    %s85 = ssub.s32 %s9, %s16
    %p86 = scmp.eq.s32.totalorder %s85, 0
    %s88 = sadd.s32 %s87, 1
    %s89 = scalar_select %p86, %s87, %s88
    %p92 = pneg %p86
    %p93 = scmp.eq.s32.totalorder %s9, 1
    %p94 = por %p92, %p93
    %p95 = scmp.ne.s32.totalorder %s87, %s90
    %p96 = scmp.eq.s32.totalorder %s9, 0
    %p97 = por %p95, %p96
    %p98 = scmp.ne.s32.totalorder %s87, %s90
    %p99 = scmp.eq.s32.totalorder %s14, 1
    %p100 = por %p98, %p99
    %p101 = scmp.ne.s32.totalorder %s90, %s91
    %p102 = scmp.eq.s32.totalorder %s14, 0
    %p103 = por %p101, %p102
    %p104 = scmp.ne.s32.totalorder %s90, %s91
    %p105 = scmp.eq.s32.totalorder %s15, 1
    %p106 = por %p104, %p105
    %p108 = scmp.ne.s32.totalorder %s91, %s107
    %p109 = scmp.eq.s32.totalorder %s15, 0
    %p110 = por %p108, %p109
    %p111 = scmp.le.s32.totalorder 1, %s9
    %p112 = scmp.lt.s32.totalorder %s9, 3
    %p113 = pnand %p111, %p112
    %p114 = pneg %p113
    // Predicated region
    $region9: #{temporal_attention.2} parent=5 // pred_check
      _
    $region10: #{temporal_attention.2} parent=5 // pred_check_branch
      %116 = sbr.rel (%p113) target = $region12
    $region11: #{temporal_attention.2} parent=5 // pred_region
      %s117 = ssub.s32 %s9, 1
      // Predicated region
      $region13: #{temporal_attention.2} parent=11 // pred_check
        %p118 = pneg %p56
      $region14: #{temporal_attention.2} parent=11 // pred_check_branch
        %120 = sbr.rel (%p118) target = $region16
      $region15: #{temporal_attention.2} parent=11 // pred_region
        _
      $region16: #{temporal_attention.2} parent=11 // pred_fallthru
        _
      // Predicated region
      $region17: #{temporal_attention.2} parent=11 // pred_check
        %p121 = pneg %p77
      $region18: #{temporal_attention.2} parent=11 // pred_check_branch
        %123 = sbr.rel (%p121) target = $region20
      $region19: #{temporal_attention.2} parent=11 // pred_region
        _
      $region20: #{temporal_attention.2} parent=11 // pred_fallthru
        _
    $region12: #{temporal_attention.2} parent=5 // pred_fallthru
      _
    %p124 = scmp.lt.s32.totalorder %s9, 2
    // Predicated region
    $region21: #{temporal_attention.2} parent=5 // pred_check
      %p125 = pneg %p124
    $region22: #{temporal_attention.2} parent=5 // pred_check_branch
      %127 = sbr.rel (%p125) target = $region24
    $region23: #{temporal_attention.2} parent=5 // pred_region
      // Predicated region
      $region25: #{temporal_attention.2} parent=23 // pred_check
        %p128 = pneg %p29
      $region26: #{temporal_attention.2} parent=23 // pred_check_branch
        %130 = sbr.rel (%p128) target = $region28
      $region27: #{temporal_attention.2} parent=23 // pred_region
        %p131 = scmp.lt.s32.totalorder %s9, 1
        %s132 = scalar_select %p131, %s9, 1
        %s133 = smul.addr %s132, 2
        %s134 = smul.addr %s133, 8
        %s135 = scalar_lea.vmem %s0, %s134
      $region28: #{temporal_attention.2} parent=23 // pred_fallthru
        _
    $region24: #{temporal_attention.2} parent=5 // pred_fallthru
      _
    %p136 = scmp.le.s32.totalorder 1, %s9
    %p137 = scmp.lt.s32.totalorder %s9, 3
    %p138 = pnand %p136, %p137
    %p139 = pneg %p138
    // Predicated region
    $region29: #{temporal_attention.2} parent=5 // pred_check
      _
    $region30: #{temporal_attention.2} parent=5 // pred_check_branch
      %141 = sbr.rel (%p138) target = $region32
    $region31: #{temporal_attention.2} parent=5 // pred_region
      %s142 = ssub.s32 %s9, 1
      %p143 = scmp.lt.s32.totalorder %s14, 1
      %s144 = scalar_select %p143, %s14, 1
      %s145 = smul.addr %s144, 2
      %s146 = smul.addr %s145, 8
      %s147 = scalar_lea.vmem %s0, %s146
      %p148 = pneg %p35
      %p149 = pneg %p32
      %p150 = pneg %p56
      %p151 = pneg %p53
      %p152 = pneg %p77
      %p153 = pneg %p74
      %p154 = pneg %p103
      %p155 = pneg %p100
      %p156 = scmp.lt.s32.totalorder %s14, 1
      %s157 = scalar_select %p156, %s14, 1
      %s158 = smul.addr %s157, 6
      %s159 = smul.addr %s158, 8
      %s160 = scalar_lea.vmem %s3, %s159
      %p161 = scmp.lt.s32.totalorder %s14, 1
      %s162 = scalar_select %p161, %s14, 1
      %s163 = smul.addr %s162, 2
      %s164 = smul.addr %s163, 8
      %s165 = scalar_lea.vmem %s0, %s164
      %p166 = scmp.lt.s32.totalorder %s14, 1
      %s167 = scalar_select %p166, %s14, 1
      %s168 = smul.addr %s167, 6
      %s169 = smul.addr %s168, 8
      %s170 = scalar_lea.vmem %s3, %s169
      %v171 = vld [vmem:[%s1] sm:$0xff]
      %v172 = vld [vmem:[%s1 + $0x8] sm:$0xff]
      %v173 = vld [vmem:[%s1 + $0x10] sm:$0xff]
      %v174 = vld [vmem:[%s1 + $0x18] sm:$0xff]
      %v175 = vld [vmem:[%s1 + $0x20] sm:$0xff]
      %v176 = vld [vmem:[%s1 + $0x28] sm:$0xff]
      %v177 = vld [vmem:[%s165] sm:$0xff]
      %v178 = vld [vmem:[%s165 + $0x8] sm:$0xff]
      %v179 = vld [vmem:[%s2] sm:$0xff]
      %v180 = vld [vmem:[%s2 + $0x8] sm:$0xff]
      %v181 = vld [vmem:[%s2 + $0x10] sm:$0xff]
      %v182 = vld [vmem:[%s2 + $0x18] sm:$0xff]
      %v183 = vld [vmem:[%s2 + $0x20] sm:$0xff]
      %v184 = vld [vmem:[%s2 + $0x28] sm:$0xff]
      %186 = vset.pattern.permute.xlu0 0
      %187 = vperm.xlu0 %186, %v179
      %v188 = vpop.permute.xlu0 %187
      %191 = vset.pattern.permute.xlu0 0
      %192 = vperm.xlu0 %191, %v180
      %v193 = vpop.permute.xlu0 %192
      %196 = vset.pattern.permute.xlu0 0
      %197 = vperm.xlu0 %196, %v181
      %v198 = vpop.permute.xlu0 %197
      %201 = vset.pattern.permute.xlu0 0
      %202 = vperm.xlu0 %201, %v182
      %v203 = vpop.permute.xlu0 %202
      %206 = vset.pattern.permute.xlu0 0
      %207 = vperm.xlu0 %206, %v183
      %v208 = vpop.permute.xlu0 %207
      %211 = vset.pattern.permute.xlu0 0
      %212 = vperm.xlu0 %211, %v184
      %v213 = vpop.permute.xlu0 %212
      %vm215 = vcmask 130048
      %v217 = vsel %vm215, %v171, 0
      %v220 = vsel %vm215, %v172, 0
      %v223 = vsel %vm215, %v173, 0
      %v226 = vsel %vm215, %v174, 0
      %v229 = vsel %vm215, %v175, 0
      %v232 = vsel %vm215, %v176, 0
      %234 = vmatpush.msra.mxu0 0.0
      %235 = vmatpush.msra.mxu0 0.0
      %236 = vmatpush.msra.mxu0 0.0
      %237 = vmatpush.msra.mxu0 0.0
      %238 = vmatpush.msra.mxu0 0.0
      %239 = vmatpush.msra.mxu0 0.0
      %240 = vmatpush.msra.mxu0 0.0
      %241 = vmatpush.msra.mxu0 0.0
      %242 = vmatpush.msra.mxu0 0.0
      %243 = vmatpush.msra.mxu0 0.0
      %244 = vmatpush.msra.mxu0 0.0
      %245 = vmatpush.msra.mxu0 0.0
      %246 = vmatpush.msra.mxu0 0.0
      %247 = vmatpush.msra.mxu0 0.0
      %248 = vmatpush.msra.mxu0 %v178
      %249 = vmatpush.msra.mxu0 %v177
      %250 = vmatmul.f32.gmra.mxu0 %v217
      %v251 = vpop.f32.mrf.mxu0
      %v252 = vadd.f32 %v188, %v251
      %253 = vmatmul.f32.gmra.mxu0 %v220
      %v254 = vpop.f32.mrf.mxu0
      %v255 = vadd.f32 %v193, %v254
      %256 = vmatmul.f32.gmra.mxu0 %v223
      %v257 = vpop.f32.mrf.mxu0
      %v258 = vadd.f32 %v198, %v257
      %259 = vmatmul.f32.gmra.mxu0 %v226
      %v260 = vpop.f32.mrf.mxu0
      %v261 = vadd.f32 %v203, %v260
      %262 = vmatmul.f32.gmra.mxu0 %v229
      %v263 = vpop.f32.mrf.mxu0
      %v264 = vadd.f32 %v208, %v263
      %265 = vmatmul.f32.gmra.mxu0 %v232
      %v266 = vpop.f32.mrf.mxu0
      %v267 = vadd.f32 %v213, %v266
      %268 = vdwg.mxu0
      %269 = vst [vmem:[%s170] sm:$0xff] %v252
      %270 = vst [vmem:[%s170 + $0x8] sm:$0xff] %v255
      %271 = vst [vmem:[%s170 + $0x10] sm:$0xff] %v258
      %272 = vst [vmem:[%s170 + $0x18] sm:$0xff] %v261
      %273 = vst [vmem:[%s170 + $0x20] sm:$0xff] %v264
      %274 = vst [vmem:[%s170 + $0x28] sm:$0xff] %v267
      %p275 = scmp.lt.s32.totalorder %s14, 1
      %s276 = scalar_select %p275, %s14, 1
      %s277 = smul.addr %s276, 6
      %s278 = smul.addr %s277, 8
      %s279 = scalar_lea.vmem %s3, %s278
      // Predicated region
      $region33: #{temporal_attention.2} parent=31 // pred_check
        %p280 = pneg %p100
      $region34: #{temporal_attention.2} parent=31 // pred_check_branch
        %282 = sbr.rel (%p280) target = $region36
      $region35: #{temporal_attention.2} parent=31 // pred_region
        _
      $region36: #{temporal_attention.2} parent=31 // pred_fallthru
        _
    $region32: #{temporal_attention.2} parent=5 // pred_fallthru
      _
    %p283 = scmp.le.s32.totalorder 2, %s9
    // Predicated region
    $region37: #{temporal_attention.2} parent=5 // pred_check
      %p284 = pneg %p283
    $region38: #{temporal_attention.2} parent=5 // pred_check_branch
      %286 = sbr.rel (%p284) target = $region40
    $region39: #{temporal_attention.2} parent=5 // pred_region
      %s287 = ssub.s32 %s9, 2
      // Predicated region
      $region41: #{temporal_attention.2} parent=39 // pred_check
        %p288 = pneg %p106
      $region42: #{temporal_attention.2} parent=39 // pred_check_branch
        %290 = sbr.rel (%p288) target = $region44
      $region43: #{temporal_attention.2} parent=39 // pred_region
        %p291 = scmp.lt.s32.totalorder %s15, 1
        %s292 = scalar_select %p291, %s15, 1
        %s293 = smul.addr %s292, 6
        %s294 = smul.addr %s293, 8
        %s295 = scalar_lea.vmem %s3, %s294
      $region44: #{temporal_attention.2} parent=39 // pred_fallthru
        _
    $region40: #{temporal_attention.2} parent=5 // pred_fallthru
      _
  $region6: #{temporal_attention.2} parent=0 // loop_footer
    %s13 = sadd.s32 1, %s9
  $region7: #{temporal_attention.2} parent=0 // loop_footer_branch
    %8 = sbr.rel target = $region3
  $region8: #{temporal_attention.2} parent=0 // loop_exit
    _

// kernel: temporal_attention.3
$region0: #{temporal_attention.3}
  #allocation0 [shape = 'u32[]', space=smem, size = 0x4, offset = 0x4, fixed_abs, tag = 'smem constant byte address 0x4 - core index']
  #allocation1 [shape = 'u32[72,128]{1,0:T(1,128)}', space=vmem, size = 0x9000, scoped, tag = 'internal scratch']
  %s0 = inlined_call_operand.vmem [shape: f32[2,48,8,16], index: 0, kind: input, shape index: {}]
  %s1 = inlined_call_operand.hbm [shape: f32[2,16,8,16], index: 1, kind: output, shape index: {}]
  %s2 = sld [smem:[#allocation0]]
  $region37: #{temporal_attention.3} parent=0
    _
  %s4 = ssub.s32 1, %s2
  %s5 = scalar_select 0, %s4, %s2
  $region1: #{temporal_attention.3} parent=0
    #allocation2 [shape = 'u8[131072]{0}', space=vmem, size = 0x20000, scoped, tag = 'output window, operand 0']
    #allocation3 [shape = 's32[2]{0}', space=sflag, size = 0x8, scoped, tag = 'scoped memory for temporal_attention.3']
    %6 = vsyncpa [#allocation3], 0
    %s7 = scalar_lea.sflag [#allocation3], 1
    %8 = vsyncpa %s7, 0
    loop: start=0, step=1, limit=4
    $region2: #{temporal_attention.3} parent=1 // loop_pre_header
      _
    $region3: #{temporal_attention.3} parent=1 // loop_header
      %s10 = sphi 0, %s14
      %p11 = scmp.ge.s32.totalorder %s10, 4
      %s20 = sphi 0, %s22
      %s23 = sphi 0, %s20
      %s24 = sphi 0, %s23
      %s40 = sphi 0, %s24
      %s46 = sphi 0, %s48
      %s49 = sphi 0, %s46
      %s50 = sphi 0, %s49
      %s66 = sphi 0, %s50
    $region4: #{temporal_attention.3} parent=1 // loop_header_branch
      %13 = sbr.rel (%p11) target = $region8
    $region5: #{temporal_attention.3} parent=1 // loop_body
      %s15 = ssub.s32 %s10, 1
      %s16 = ssub.s32 %s10, 2
      %s17 = sadd.s32 %s10, 1
      %s18 = ssub.s32 %s10, %s17
      %p19 = scmp.eq.s32.totalorder %s18, 0
      %s21 = sadd.s32 %s20, 1
      %s22 = scalar_select %p19, %s20, %s21
      %p25 = pneg %p19
      %p26 = scmp.eq.s32.totalorder %s10, 1
      %p27 = por %p25, %p26
      %p28 = scmp.ne.s32.totalorder %s20, %s23
      %p29 = scmp.eq.s32.totalorder %s10, 0
      %p30 = por %p28, %p29
      %p31 = scmp.ne.s32.totalorder %s20, %s23
      %p32 = scmp.eq.s32.totalorder %s15, 1
      %p33 = por %p31, %p32
      %p34 = scmp.ne.s32.totalorder %s23, %s24
      %p35 = scmp.eq.s32.totalorder %s15, 0
      %p36 = por %p34, %p35
      %p37 = scmp.ne.s32.totalorder %s23, %s24
      %p38 = scmp.eq.s32.totalorder %s16, 1
      %p39 = por %p37, %p38
      %p41 = scmp.ne.s32.totalorder %s24, %s40
      %p42 = scmp.eq.s32.totalorder %s16, 0
      %p43 = por %p41, %p42
      %s44 = ssub.s32 %s10, %s17
      %p45 = scmp.eq.s32.totalorder %s44, 0
      %s47 = sadd.s32 %s46, 1
      %s48 = scalar_select %p45, %s46, %s47
      %p51 = pneg %p45
      %p52 = scmp.eq.s32.totalorder %s10, 1
      %p53 = por %p51, %p52
      %p54 = scmp.ne.s32.totalorder %s46, %s49
      %p55 = scmp.eq.s32.totalorder %s10, 0
      %p56 = por %p54, %p55
      %p57 = scmp.ne.s32.totalorder %s46, %s49
      %p58 = scmp.eq.s32.totalorder %s15, 1
      %p59 = por %p57, %p58
      %p60 = scmp.ne.s32.totalorder %s49, %s50
      %p61 = scmp.eq.s32.totalorder %s15, 0
      %p62 = por %p60, %p61
      %p63 = scmp.ne.s32.totalorder %s49, %s50
      %p64 = scmp.eq.s32.totalorder %s16, 1
      %p65 = por %p63, %p64
      %p67 = scmp.ne.s32.totalorder %s50, %s66
      %p68 = scmp.eq.s32.totalorder %s16, 0
      %p69 = por %p67, %p68
      %p70 = scmp.le.s32.totalorder 1, %s10
      %p71 = scmp.lt.s32.totalorder %s10, 3
      %p72 = pnand %p70, %p71
      %p73 = pneg %p72
      // Predicated region
      $region9: #{temporal_attention.3} parent=5 // pred_check
        _
      $region10: #{temporal_attention.3} parent=5 // pred_check_branch
        %75 = sbr.rel (%p72) target = $region12
      $region11: #{temporal_attention.3} parent=5 // pred_region
        %s76 = ssub.s32 %s10, 1
      $region12: #{temporal_attention.3} parent=5 // pred_fallthru
        _
      %p77 = scmp.lt.s32.totalorder %s10, 2
      // Predicated region
      $region13: #{temporal_attention.3} parent=5 // pred_check
        %p78 = pneg %p77
      $region14: #{temporal_attention.3} parent=5 // pred_check_branch
        %80 = sbr.rel (%p78) target = $region16
      $region15: #{temporal_attention.3} parent=5 // pred_region
        // Predicated region
        $region17: #{temporal_attention.3} parent=15 // pred_check
          %p81 = pneg %p30
        $region18: #{temporal_attention.3} parent=15 // pred_check_branch
          %83 = sbr.rel (%p81) target = $region20
        $region19: #{temporal_attention.3} parent=15 // pred_region
          %p84 = scmp.lt.s32.totalorder %s10, 1
          %s85 = scalar_select %p84, %s10, 1
          %s86 = smul.addr %s85, 48
          %s87 = smul.addr %s86, 8
          %s88 = scalar_lea.vmem %s0, %s87
        $region20: #{temporal_attention.3} parent=15 // pred_fallthru
          _
      $region16: #{temporal_attention.3} parent=5 // pred_fallthru
        _
      %p89 = scmp.le.s32.totalorder 1, %s10
      %p90 = scmp.lt.s32.totalorder %s10, 3
      %p91 = pnand %p89, %p90
      %p92 = pneg %p91
      // Predicated region
      $region21: #{temporal_attention.3} parent=5 // pred_check
        _
      $region22: #{temporal_attention.3} parent=5 // pred_check_branch
        %94 = sbr.rel (%p91) target = $region24
      $region23: #{temporal_attention.3} parent=5 // pred_region
        %s95 = ssub.s32 %s10, 1
        %p96 = scmp.lt.s32.totalorder %s15, 1
        %s97 = scalar_select %p96, %s15, 1
        %s98 = smul.addr %s97, 48
        %s99 = smul.addr %s98, 8
        %s100 = scalar_lea.vmem %s0, %s99
        %p101 = pneg %p36
        %p102 = pneg %p33
        %p103 = pneg %p62
        %p104 = pneg %p59
        %s105 = sand.u32 %s49, 1
        %s106 = scalar_lea.sflag [#allocation3], %s105
        %s107 = sand.u32 %s49, 1
        %s108 = smul.addr %s107, 128
        %s109 = scalar_lea.vmem [#allocation2], %s108
        %p110 = scmp.lt.s32.totalorder %s15, 1
        %s111 = scalar_select %p110, %s15, 1
        %s112 = smul.addr %s111, 48
        %s113 = smul.addr %s112, 8
        %s114 = scalar_lea.vmem %s0, %s113
        %v115 = vld [vmem:[%s114] sm:$0xff]
        %v116 = vld [vmem:[%s114 + $0x8] sm:$0xff]
        %v117 = vld [vmem:[%s114 + $0x10] sm:$0xff]
        %v118 = vld [vmem:[%s114 + $0x18] sm:$0xff]
        %v119 = vld [vmem:[%s114 + $0x20] sm:$0xff]
        %v120 = vld [vmem:[%s114 + $0x28] sm:$0xff]
        %v121 = vld [vmem:[%s114 + $0x30] sm:$0xff]
        %v122 = vld [vmem:[%s114 + $0x38] sm:$0xff]
        %v123 = vld [vmem:[%s114 + $0x40] sm:$0xff]
        %v124 = vld [vmem:[%s114 + $0x48] sm:$0xff]
        %v125 = vld [vmem:[%s114 + $0x50] sm:$0xff]
        %v126 = vld [vmem:[%s114 + $0x58] sm:$0xff]
        %v127 = vld [vmem:[%s114 + $0x60] sm:$0xff]
        %v128 = vld [vmem:[%s114 + $0x68] sm:$0xff]
        %v129 = vld [vmem:[%s114 + $0x70] sm:$0xff]
        %v130 = vld [vmem:[%s114 + $0x78] sm:$0xff]
        %v131 = vld [vmem:[%s114 + $0x80] sm:$0xff]
        %v132 = vld [vmem:[%s114 + $0x88] sm:$0xff]
        %v133 = vld [vmem:[%s114 + $0x90] sm:$0xff]
        %v134 = vld [vmem:[%s114 + $0x98] sm:$0xff]
        %v135 = vld [vmem:[%s114 + $0xa0] sm:$0xff]
        %v136 = vld [vmem:[%s114 + $0xa8] sm:$0xff]
        %v137 = vld [vmem:[%s114 + $0xb0] sm:$0xff]
        %v138 = vld [vmem:[%s114 + $0xb8] sm:$0xff]
        %v139 = vld [vmem:[%s114 + $0xc0] sm:$0xff]
        %v140 = vld [vmem:[%s114 + $0xc8] sm:$0xff]
        %v141 = vld [vmem:[%s114 + $0xd0] sm:$0xff]
        %v142 = vld [vmem:[%s114 + $0xd8] sm:$0xff]
        %v143 = vld [vmem:[%s114 + $0xe0] sm:$0xff]
        %v144 = vld [vmem:[%s114 + $0xe8] sm:$0xff]
        %v145 = vld [vmem:[%s114 + $0xf0] sm:$0xff]
        %v146 = vld [vmem:[%s114 + $0xf8] sm:$0xff]
        %v147 = vld [vmem:[%s114 + $0x100] sm:$0xff]
        %v148 = vld [vmem:[%s114 + $0x108] sm:$0xff]
        %v149 = vld [vmem:[%s114 + $0x110] sm:$0xff]
        %v150 = vld [vmem:[%s114 + $0x118] sm:$0xff]
        %v151 = vld [vmem:[%s114 + $0x120] sm:$0xff]
        %v152 = vld [vmem:[%s114 + $0x128] sm:$0xff]
        %v153 = vld [vmem:[%s114 + $0x130] sm:$0xff]
        %v154 = vld [vmem:[%s114 + $0x138] sm:$0xff]
        %v155 = vld [vmem:[%s114 + $0x140] sm:$0xff]
        %v156 = vld [vmem:[%s114 + $0x148] sm:$0xff]
        %v157 = vld [vmem:[%s114 + $0x150] sm:$0xff]
        %v158 = vld [vmem:[%s114 + $0x158] sm:$0xff]
        %v159 = vld [vmem:[%s114 + $0x160] sm:$0xff]
        %v160 = vld [vmem:[%s114 + $0x168] sm:$0xff]
        %v161 = vld [vmem:[%s114 + $0x170] sm:$0xff]
        %v162 = vld [vmem:[%s114 + $0x178] sm:$0xff]
        %vm163 = vcmask 130048
        %v165 = vsel %vm163, %v115, 0
        %v168 = vsel %vm163, %v131, 0
        %170 = vmatpush.xpose.msra.mxu0 0.0
        %171 = vmatpush.xpose.msra.mxu0 0.0
        %172 = vmatpush.xpose.msra.mxu0 0.0
        %173 = vmatpush.xpose.msra.mxu0 0.0
        %174 = vmatpush.xpose.msra.mxu0 0.0
        %175 = vmatpush.xpose.msra.mxu0 0.0
        %176 = vmatpush.xpose.msra.mxu0 0.0
        %177 = vmatpush.xpose.msra.mxu0 0.0
        %178 = vmatpush.xpose.msra.mxu0 0.0
        %179 = vmatpush.xpose.msra.mxu0 0.0
        %180 = vmatpush.xpose.msra.mxu0 0.0
        %181 = vmatpush.xpose.msra.mxu0 0.0
        %182 = vmatpush.xpose.msra.mxu0 0.0
        %183 = vmatpush.xpose.msra.mxu0 0.0
        %184 = vmatpush.xpose.msra.mxu0 0.0
        %185 = vmatpush.xpose.msra.mxu0 %v168
        %186 = vmatmul.f32.gmra.mxu0 %v165
        %v187 = vpop.f32.mrf.mxu0
        %v188 = vadd.f32 0.0, %v187
        %189 = vdwg.mxu0
        %v191 = vsel %vm163, %v116, 0
        %v194 = vsel %vm163, %v132, 0
        %196 = vmatpush.xpose.msra.mxu0 0.0
        %197 = vmatpush.xpose.msra.mxu0 0.0
        %198 = vmatpush.xpose.msra.mxu0 0.0
        %199 = vmatpush.xpose.msra.mxu0 0.0
        %200 = vmatpush.xpose.msra.mxu0 0.0
        %201 = vmatpush.xpose.msra.mxu0 0.0
        %202 = vmatpush.xpose.msra.mxu0 0.0
        %203 = vmatpush.xpose.msra.mxu0 0.0
        %204 = vmatpush.xpose.msra.mxu0 0.0
        %205 = vmatpush.xpose.msra.mxu0 0.0
        %206 = vmatpush.xpose.msra.mxu0 0.0
        %207 = vmatpush.xpose.msra.mxu0 0.0
        %208 = vmatpush.xpose.msra.mxu0 0.0
        %209 = vmatpush.xpose.msra.mxu0 0.0
        %210 = vmatpush.xpose.msra.mxu0 0.0
        %211 = vmatpush.xpose.msra.mxu0 %v194
        %212 = vmatmul.f32.gmra.mxu0 %v191
        %v213 = vpop.f32.mrf.mxu0
        %v214 = vadd.f32 0.0, %v213
        %215 = vdwg.mxu0
        %v217 = vsel %vm163, %v117, 0
        %v220 = vsel %vm163, %v133, 0
        %222 = vmatpush.xpose.msra.mxu0 0.0
        %223 = vmatpush.xpose.msra.mxu0 0.0
        %224 = vmatpush.xpose.msra.mxu0 0.0
        %225 = vmatpush.xpose.msra.mxu0 0.0
        %226 = vmatpush.xpose.msra.mxu0 0.0
        %227 = vmatpush.xpose.msra.mxu0 0.0
        %228 = vmatpush.xpose.msra.mxu0 0.0
        %229 = vmatpush.xpose.msra.mxu0 0.0
        %230 = vmatpush.xpose.msra.mxu0 0.0
        %231 = vmatpush.xpose.msra.mxu0 0.0
        %232 = vmatpush.xpose.msra.mxu0 0.0
        %233 = vmatpush.xpose.msra.mxu0 0.0
        %234 = vmatpush.xpose.msra.mxu0 0.0
        %235 = vmatpush.xpose.msra.mxu0 0.0
        %236 = vmatpush.xpose.msra.mxu0 0.0
        %237 = vmatpush.xpose.msra.mxu0 %v220
        %238 = vmatmul.f32.gmra.mxu0 %v217
        %v239 = vpop.f32.mrf.mxu0
        %v240 = vadd.f32 0.0, %v239
        %241 = vdwg.mxu0
        %v243 = vsel %vm163, %v118, 0
        %v246 = vsel %vm163, %v134, 0
        %248 = vmatpush.xpose.msra.mxu0 0.0
        %249 = vmatpush.xpose.msra.mxu0 0.0
        %250 = vmatpush.xpose.msra.mxu0 0.0
        %251 = vmatpush.xpose.msra.mxu0 0.0
        %252 = vmatpush.xpose.msra.mxu0 0.0
        %253 = vmatpush.xpose.msra.mxu0 0.0
        %254 = vmatpush.xpose.msra.mxu0 0.0
        %255 = vmatpush.xpose.msra.mxu0 0.0
        %256 = vmatpush.xpose.msra.mxu0 0.0
        %257 = vmatpush.xpose.msra.mxu0 0.0
        %258 = vmatpush.xpose.msra.mxu0 0.0
        %259 = vmatpush.xpose.msra.mxu0 0.0
        %260 = vmatpush.xpose.msra.mxu0 0.0
        %261 = vmatpush.xpose.msra.mxu0 0.0
        %262 = vmatpush.xpose.msra.mxu0 0.0
        %263 = vmatpush.xpose.msra.mxu0 %v246
        %264 = vmatmul.f32.gmra.mxu0 %v243
        %v265 = vpop.f32.mrf.mxu0
        %v266 = vadd.f32 0.0, %v265
        %267 = vdwg.mxu0
        %v269 = vsel %vm163, %v119, 0
        %v272 = vsel %vm163, %v135, 0
        %274 = vmatpush.xpose.msra.mxu0 0.0
        %275 = vmatpush.xpose.msra.mxu0 0.0
        %276 = vmatpush.xpose.msra.mxu0 0.0
        %277 = vmatpush.xpose.msra.mxu0 0.0
        %278 = vmatpush.xpose.msra.mxu0 0.0
        %279 = vmatpush.xpose.msra.mxu0 0.0
        %280 = vmatpush.xpose.msra.mxu0 0.0
        %281 = vmatpush.xpose.msra.mxu0 0.0
        %282 = vmatpush.xpose.msra.mxu0 0.0
        %283 = vmatpush.xpose.msra.mxu0 0.0
        %284 = vmatpush.xpose.msra.mxu0 0.0
        %285 = vmatpush.xpose.msra.mxu0 0.0
        %286 = vmatpush.xpose.msra.mxu0 0.0
        %287 = vmatpush.xpose.msra.mxu0 0.0
        %288 = vmatpush.xpose.msra.mxu0 0.0
        %289 = vmatpush.xpose.msra.mxu0 %v272
        %290 = vmatmul.f32.gmra.mxu0 %v269
        %v291 = vpop.f32.mrf.mxu0
        %v292 = vadd.f32 0.0, %v291
        %293 = vdwg.mxu0
        %v295 = vsel %vm163, %v120, 0
        %v298 = vsel %vm163, %v136, 0
        %300 = vmatpush.xpose.msra.mxu0 0.0
        %301 = vmatpush.xpose.msra.mxu0 0.0
        %302 = vmatpush.xpose.msra.mxu0 0.0
        %303 = vmatpush.xpose.msra.mxu0 0.0
        %304 = vmatpush.xpose.msra.mxu0 0.0
        %305 = vmatpush.xpose.msra.mxu0 0.0
        %306 = vmatpush.xpose.msra.mxu0 0.0
        %307 = vmatpush.xpose.msra.mxu0 0.0
        %308 = vmatpush.xpose.msra.mxu0 0.0
        %309 = vmatpush.xpose.msra.mxu0 0.0
        %310 = vmatpush.xpose.msra.mxu0 0.0
        %311 = vmatpush.xpose.msra.mxu0 0.0
        %312 = vmatpush.xpose.msra.mxu0 0.0
        %313 = vmatpush.xpose.msra.mxu0 0.0
        %314 = vmatpush.xpose.msra.mxu0 0.0
        %315 = vmatpush.xpose.msra.mxu0 %v298
        %316 = vmatmul.f32.gmra.mxu0 %v295
        %v317 = vpop.f32.mrf.mxu0
        %v318 = vadd.f32 0.0, %v317
        %319 = vdwg.mxu0
        %v321 = vsel %vm163, %v121, 0
        %v324 = vsel %vm163, %v137, 0
        %326 = vmatpush.xpose.msra.mxu0 0.0
        %327 = vmatpush.xpose.msra.mxu0 0.0
        %328 = vmatpush.xpose.msra.mxu0 0.0
        %329 = vmatpush.xpose.msra.mxu0 0.0
        %330 = vmatpush.xpose.msra.mxu0 0.0
        %331 = vmatpush.xpose.msra.mxu0 0.0
        %332 = vmatpush.xpose.msra.mxu0 0.0
        %333 = vmatpush.xpose.msra.mxu0 0.0
        %334 = vmatpush.xpose.msra.mxu0 0.0
        %335 = vmatpush.xpose.msra.mxu0 0.0
        %336 = vmatpush.xpose.msra.mxu0 0.0
        %337 = vmatpush.xpose.msra.mxu0 0.0
        %338 = vmatpush.xpose.msra.mxu0 0.0
        %339 = vmatpush.xpose.msra.mxu0 0.0
        %340 = vmatpush.xpose.msra.mxu0 0.0
        %341 = vmatpush.xpose.msra.mxu0 %v324
        %342 = vmatmul.f32.gmra.mxu0 %v321
        %v343 = vpop.f32.mrf.mxu0
        %v344 = vadd.f32 0.0, %v343
        %345 = vdwg.mxu0
        %v347 = vsel %vm163, %v122, 0
        %v350 = vsel %vm163, %v138, 0
        %352 = vmatpush.xpose.msra.mxu0 0.0
        %353 = vmatpush.xpose.msra.mxu0 0.0
        %354 = vmatpush.xpose.msra.mxu0 0.0
        %355 = vmatpush.xpose.msra.mxu0 0.0
        %356 = vmatpush.xpose.msra.mxu0 0.0
        %357 = vmatpush.xpose.msra.mxu0 0.0
        %358 = vmatpush.xpose.msra.mxu0 0.0
        %359 = vmatpush.xpose.msra.mxu0 0.0
        %360 = vmatpush.xpose.msra.mxu0 0.0
        %361 = vmatpush.xpose.msra.mxu0 0.0
        %362 = vmatpush.xpose.msra.mxu0 0.0
        %363 = vmatpush.xpose.msra.mxu0 0.0
        %364 = vmatpush.xpose.msra.mxu0 0.0
        %365 = vmatpush.xpose.msra.mxu0 0.0
        %366 = vmatpush.xpose.msra.mxu0 0.0
        %367 = vmatpush.xpose.msra.mxu0 %v350
        %368 = vmatmul.f32.gmra.mxu0 %v347
        %v369 = vpop.f32.mrf.mxu0
        %v370 = vadd.f32 0.0, %v369
        %371 = vdwg.mxu0
        %v373 = vsel %vm163, %v123, 0
        %v376 = vsel %vm163, %v139, 0
        %378 = vmatpush.xpose.msra.mxu0 0.0
        %379 = vmatpush.xpose.msra.mxu0 0.0
        %380 = vmatpush.xpose.msra.mxu0 0.0
        %381 = vmatpush.xpose.msra.mxu0 0.0
        %382 = vmatpush.xpose.msra.mxu0 0.0
        %383 = vmatpush.xpose.msra.mxu0 0.0
        %384 = vmatpush.xpose.msra.mxu0 0.0
        %385 = vmatpush.xpose.msra.mxu0 0.0
        %386 = vmatpush.xpose.msra.mxu0 0.0
        %387 = vmatpush.xpose.msra.mxu0 0.0
        %388 = vmatpush.xpose.msra.mxu0 0.0
        %389 = vmatpush.xpose.msra.mxu0 0.0
        %390 = vmatpush.xpose.msra.mxu0 0.0
        %391 = vmatpush.xpose.msra.mxu0 0.0
        %392 = vmatpush.xpose.msra.mxu0 0.0
        %393 = vmatpush.xpose.msra.mxu0 %v376
        %394 = vmatmul.f32.gmra.mxu0 %v373
        %v395 = vpop.f32.mrf.mxu0
        %v396 = vadd.f32 0.0, %v395
        %397 = vdwg.mxu0
        %v399 = vsel %vm163, %v124, 0
        %v402 = vsel %vm163, %v140, 0
        %404 = vmatpush.xpose.msra.mxu0 0.0
        %405 = vmatpush.xpose.msra.mxu0 0.0
        %406 = vmatpush.xpose.msra.mxu0 0.0
        %407 = vmatpush.xpose.msra.mxu0 0.0
        %408 = vmatpush.xpose.msra.mxu0 0.0
        %409 = vmatpush.xpose.msra.mxu0 0.0
        %410 = vmatpush.xpose.msra.mxu0 0.0
        %411 = vmatpush.xpose.msra.mxu0 0.0
        %412 = vmatpush.xpose.msra.mxu0 0.0
        %413 = vmatpush.xpose.msra.mxu0 0.0
        %414 = vmatpush.xpose.msra.mxu0 0.0
        %415 = vmatpush.xpose.msra.mxu0 0.0
        %416 = vmatpush.xpose.msra.mxu0 0.0
        %417 = vmatpush.xpose.msra.mxu0 0.0
        %418 = vmatpush.xpose.msra.mxu0 0.0
        %419 = vmatpush.xpose.msra.mxu0 %v402
        %420 = vmatmul.f32.gmra.mxu0 %v399
        %v421 = vpop.f32.mrf.mxu0
        %v422 = vadd.f32 0.0, %v421
        %423 = vdwg.mxu0
        %v425 = vsel %vm163, %v125, 0
        %v428 = vsel %vm163, %v141, 0
        %430 = vmatpush.xpose.msra.mxu0 0.0
        %431 = vmatpush.xpose.msra.mxu0 0.0
        %432 = vmatpush.xpose.msra.mxu0 0.0
        %433 = vmatpush.xpose.msra.mxu0 0.0
        %434 = vmatpush.xpose.msra.mxu0 0.0
        %435 = vmatpush.xpose.msra.mxu0 0.0
        %436 = vmatpush.xpose.msra.mxu0 0.0
        %437 = vmatpush.xpose.msra.mxu0 0.0
        %438 = vmatpush.xpose.msra.mxu0 0.0
        %439 = vmatpush.xpose.msra.mxu0 0.0
        %440 = vmatpush.xpose.msra.mxu0 0.0
        %441 = vmatpush.xpose.msra.mxu0 0.0
        %442 = vmatpush.xpose.msra.mxu0 0.0
        %443 = vmatpush.xpose.msra.mxu0 0.0
        %444 = vmatpush.xpose.msra.mxu0 0.0
        %445 = vmatpush.xpose.msra.mxu0 %v428
        %446 = vmatmul.f32.gmra.mxu0 %v425
        %v447 = vpop.f32.mrf.mxu0
        %v448 = vadd.f32 0.0, %v447
        %449 = vdwg.mxu0
        %v451 = vsel %vm163, %v126, 0
        %v454 = vsel %vm163, %v142, 0
        %456 = vmatpush.xpose.msra.mxu0 0.0
        %457 = vmatpush.xpose.msra.mxu0 0.0
        %458 = vmatpush.xpose.msra.mxu0 0.0
        %459 = vmatpush.xpose.msra.mxu0 0.0
        %460 = vmatpush.xpose.msra.mxu0 0.0
        %461 = vmatpush.xpose.msra.mxu0 0.0
        %462 = vmatpush.xpose.msra.mxu0 0.0
        %463 = vmatpush.xpose.msra.mxu0 0.0
        %464 = vmatpush.xpose.msra.mxu0 0.0
        %465 = vmatpush.xpose.msra.mxu0 0.0
        %466 = vmatpush.xpose.msra.mxu0 0.0
        %467 = vmatpush.xpose.msra.mxu0 0.0
        %468 = vmatpush.xpose.msra.mxu0 0.0
        %469 = vmatpush.xpose.msra.mxu0 0.0
        %470 = vmatpush.xpose.msra.mxu0 0.0
        %471 = vmatpush.xpose.msra.mxu0 %v454
        %472 = vmatmul.f32.gmra.mxu0 %v451
        %v473 = vpop.f32.mrf.mxu0
        %v474 = vadd.f32 0.0, %v473
        %475 = vdwg.mxu0
        %v477 = vsel %vm163, %v127, 0
        %v480 = vsel %vm163, %v143, 0
        %482 = vmatpush.xpose.msra.mxu0 0.0
        %483 = vmatpush.xpose.msra.mxu0 0.0
        %484 = vmatpush.xpose.msra.mxu0 0.0
        %485 = vmatpush.xpose.msra.mxu0 0.0
        %486 = vmatpush.xpose.msra.mxu0 0.0
        %487 = vmatpush.xpose.msra.mxu0 0.0
        %488 = vmatpush.xpose.msra.mxu0 0.0
        %489 = vmatpush.xpose.msra.mxu0 0.0
        %490 = vmatpush.xpose.msra.mxu0 0.0
        %491 = vmatpush.xpose.msra.mxu0 0.0
        %492 = vmatpush.xpose.msra.mxu0 0.0
        %493 = vmatpush.xpose.msra.mxu0 0.0
        %494 = vmatpush.xpose.msra.mxu0 0.0
        %495 = vmatpush.xpose.msra.mxu0 0.0
        %496 = vmatpush.xpose.msra.mxu0 0.0
        %497 = vmatpush.xpose.msra.mxu0 %v480
        %498 = vmatmul.f32.gmra.mxu0 %v477
        %v499 = vpop.f32.mrf.mxu0
        %v500 = vadd.f32 0.0, %v499
        %501 = vdwg.mxu0
        %v503 = vsel %vm163, %v128, 0
        %v506 = vsel %vm163, %v144, 0
        %508 = vmatpush.xpose.msra.mxu0 0.0
        %509 = vmatpush.xpose.msra.mxu0 0.0
        %510 = vmatpush.xpose.msra.mxu0 0.0
        %511 = vmatpush.xpose.msra.mxu0 0.0
        %512 = vmatpush.xpose.msra.mxu0 0.0
        %513 = vmatpush.xpose.msra.mxu0 0.0
        %514 = vmatpush.xpose.msra.mxu0 0.0
        %515 = vmatpush.xpose.msra.mxu0 0.0
        %516 = vmatpush.xpose.msra.mxu0 0.0
        %517 = vmatpush.xpose.msra.mxu0 0.0
        %518 = vmatpush.xpose.msra.mxu0 0.0
        %519 = vmatpush.xpose.msra.mxu0 0.0
        %520 = vmatpush.xpose.msra.mxu0 0.0
        %521 = vmatpush.xpose.msra.mxu0 0.0
        %522 = vmatpush.xpose.msra.mxu0 0.0
        %523 = vmatpush.xpose.msra.mxu0 %v506
        %524 = vmatmul.f32.gmra.mxu0 %v503
        %v525 = vpop.f32.mrf.mxu0
        %v526 = vadd.f32 0.0, %v525
        %527 = vdwg.mxu0
        %v529 = vsel %vm163, %v129, 0
        %v532 = vsel %vm163, %v145, 0
        %534 = vmatpush.xpose.msra.mxu0 0.0
        %535 = vmatpush.xpose.msra.mxu0 0.0
        %536 = vmatpush.xpose.msra.mxu0 0.0
        %537 = vmatpush.xpose.msra.mxu0 0.0
        %538 = vmatpush.xpose.msra.mxu0 0.0
        %539 = vmatpush.xpose.msra.mxu0 0.0
        %540 = vmatpush.xpose.msra.mxu0 0.0
        %541 = vmatpush.xpose.msra.mxu0 0.0
        %542 = vmatpush.xpose.msra.mxu0 0.0
        %543 = vmatpush.xpose.msra.mxu0 0.0
        %544 = vmatpush.xpose.msra.mxu0 0.0
        %545 = vmatpush.xpose.msra.mxu0 0.0
        %546 = vmatpush.xpose.msra.mxu0 0.0
        %547 = vmatpush.xpose.msra.mxu0 0.0
        %548 = vmatpush.xpose.msra.mxu0 0.0
        %549 = vmatpush.xpose.msra.mxu0 %v532
        %550 = vmatmul.f32.gmra.mxu0 %v529
        %v551 = vpop.f32.mrf.mxu0
        %v552 = vadd.f32 0.0, %v551
        %553 = vdwg.mxu0
        %v555 = vsel %vm163, %v130, 0
        %v558 = vsel %vm163, %v146, 0
        %560 = vmatpush.xpose.msra.mxu0 0.0
        %561 = vmatpush.xpose.msra.mxu0 0.0
        %562 = vmatpush.xpose.msra.mxu0 0.0
        %563 = vmatpush.xpose.msra.mxu0 0.0
        %564 = vmatpush.xpose.msra.mxu0 0.0
        %565 = vmatpush.xpose.msra.mxu0 0.0
        %566 = vmatpush.xpose.msra.mxu0 0.0
        %567 = vmatpush.xpose.msra.mxu0 0.0
        %568 = vmatpush.xpose.msra.mxu0 0.0
        %569 = vmatpush.xpose.msra.mxu0 0.0
        %570 = vmatpush.xpose.msra.mxu0 0.0
        %571 = vmatpush.xpose.msra.mxu0 0.0
        %572 = vmatpush.xpose.msra.mxu0 0.0
        %573 = vmatpush.xpose.msra.mxu0 0.0
        %574 = vmatpush.xpose.msra.mxu0 0.0
        %575 = vmatpush.xpose.msra.mxu0 %v558
        %576 = vmatmul.f32.gmra.mxu0 %v555
        %v577 = vpop.f32.mrf.mxu0
        %v578 = vadd.f32 0.0, %v577
        %579 = vdwg.mxu0
        %v580 = vmul.f32 %v188, 0.70710677
        %v581 = vmul.f32 %v214, 0.70710677
        %v582 = vmul.f32 %v240, 0.70710677
        %v583 = vmul.f32 %v266, 0.70710677
        %v584 = vmul.f32 %v292, 0.70710677
        %v585 = vmul.f32 %v318, 0.70710677
        %v586 = vmul.f32 %v344, 0.70710677
        %v587 = vmul.f32 %v370, 0.70710677
        %v588 = vmul.f32 %v396, 0.70710677
        %v589 = vmul.f32 %v422, 0.70710677
        %v590 = vmul.f32 %v448, 0.70710677
        %v591 = vmul.f32 %v474, 0.70710677
        %v592 = vmul.f32 %v500, 0.70710677
        %v593 = vmul.f32 %v526, 0.70710677
        %v594 = vmul.f32 %v552, 0.70710677
        %v595 = vmul.f32 %v578, 0.70710677
        %vm596 = vcmask 64512
        %v597 = vsel %vm596, %v580, -inf
        %598 = vmax.xlane.f32.xlu0 %v597
        %v599 = vpop.xlane.xlu0 %598
        %v600 = vsel %vm596, %v581, -inf
        %601 = vmax.xlane.f32.xlu0 %v600
        %v602 = vpop.xlane.xlu0 %601
        %v603 = vsel %vm596, %v582, -inf
        %604 = vmax.xlane.f32.xlu0 %v603
        %v605 = vpop.xlane.xlu0 %604
        %v606 = vsel %vm596, %v583, -inf
        %607 = vmax.xlane.f32.xlu0 %v606
        %v608 = vpop.xlane.xlu0 %607
        %v609 = vsel %vm596, %v584, -inf
        %610 = vmax.xlane.f32.xlu0 %v609
        %v611 = vpop.xlane.xlu0 %610
        %v612 = vsel %vm596, %v585, -inf
        %613 = vmax.xlane.f32.xlu0 %v612
        %v614 = vpop.xlane.xlu0 %613
        %v615 = vsel %vm596, %v586, -inf
        %616 = vmax.xlane.f32.xlu0 %v615
        %v617 = vpop.xlane.xlu0 %616
        %v618 = vsel %vm596, %v587, -inf
        %619 = vmax.xlane.f32.xlu0 %v618
        %v620 = vpop.xlane.xlu0 %619
        %v621 = vsel %vm596, %v588, -inf
        %622 = vmax.xlane.f32.xlu0 %v621
        %v623 = vpop.xlane.xlu0 %622
        %v624 = vsel %vm596, %v589, -inf
        %625 = vmax.xlane.f32.xlu0 %v624
        %v626 = vpop.xlane.xlu0 %625
        %v627 = vsel %vm596, %v590, -inf
        %628 = vmax.xlane.f32.xlu0 %v627
        %v629 = vpop.xlane.xlu0 %628
        %v630 = vsel %vm596, %v591, -inf
        %631 = vmax.xlane.f32.xlu0 %v630
        %v632 = vpop.xlane.xlu0 %631
        %v633 = vsel %vm596, %v592, -inf
        %634 = vmax.xlane.f32.xlu0 %v633
        %v635 = vpop.xlane.xlu0 %634
        %v636 = vsel %vm596, %v593, -inf
        %637 = vmax.xlane.f32.xlu0 %v636
        %v638 = vpop.xlane.xlu0 %637
        %v639 = vsel %vm596, %v594, -inf
        %640 = vmax.xlane.f32.xlu0 %v639
        %v641 = vpop.xlane.xlu0 %640
        %v642 = vsel %vm596, %v595, -inf
        %643 = vmax.xlane.f32.xlu0 %v642
        %v644 = vpop.xlane.xlu0 %643
        %v645 = vsub.f32 %v580, %v599
        %v646 = vsub.f32 %v581, %v602
        %v647 = vsub.f32 %v582, %v605
        %v648 = vsub.f32 %v583, %v608
        %v649 = vsub.f32 %v584, %v611
        %v650 = vsub.f32 %v585, %v614
        %v651 = vsub.f32 %v586, %v617
        %v652 = vsub.f32 %v587, %v620
        %v653 = vsub.f32 %v588, %v623
        %v654 = vsub.f32 %v589, %v626
        %v655 = vsub.f32 %v590, %v629
        %v656 = vsub.f32 %v591, %v632
        %v657 = vsub.f32 %v592, %v635
        %v658 = vsub.f32 %v593, %v638
        %v659 = vsub.f32 %v594, %v641
        %v660 = vsub.f32 %v595, %v644
        %v661 = vmul.f32 %v645, 1.442695
        %v662 = vpow.pop %v661
        %v663 = vmul.f32 %v646, 1.442695
        %v664 = vpow.pop %v663
        %v665 = vmul.f32 %v647, 1.442695
        %v666 = vpow.pop %v665
        %v667 = vmul.f32 %v648, 1.442695
        %v668 = vpow.pop %v667
        %v669 = vmul.f32 %v649, 1.442695
        %v670 = vpow.pop %v669
        %v671 = vmul.f32 %v650, 1.442695
        %v672 = vpow.pop %v671
        %v673 = vmul.f32 %v651, 1.442695
        %v674 = vpow.pop %v673
        %v675 = vmul.f32 %v652, 1.442695
        %v676 = vpow.pop %v675
        %v677 = vmul.f32 %v653, 1.442695
        %v678 = vpow.pop %v677
        %v679 = vmul.f32 %v654, 1.442695
        %v680 = vpow.pop %v679
        %v681 = vmul.f32 %v655, 1.442695
        %v682 = vpow.pop %v681
        %v683 = vmul.f32 %v656, 1.442695
        %v684 = vpow.pop %v683
        %v685 = vmul.f32 %v657, 1.442695
        %v686 = vpow.pop %v685
        %v687 = vmul.f32 %v658, 1.442695
        %v688 = vpow.pop %v687
        %v689 = vmul.f32 %v659, 1.442695
        %v690 = vpow.pop %v689
        %v691 = vmul.f32 %v660, 1.442695
        %v692 = vpow.pop %v691
        %v693 = vsel %vm596, %v662, 0.0
        %694 = vadd.xlane.f32.xlu0 %v693
        %v695 = vpop.xlane.xlu0 %694
        %v696 = vsel %vm596, %v664, 0.0
        %697 = vadd.xlane.f32.xlu0 %v696
        %v698 = vpop.xlane.xlu0 %697
        %v699 = vsel %vm596, %v666, 0.0
        %700 = vadd.xlane.f32.xlu0 %v699
        %v701 = vpop.xlane.xlu0 %700
        %v702 = vsel %vm596, %v668, 0.0
        %703 = vadd.xlane.f32.xlu0 %v702
        %v704 = vpop.xlane.xlu0 %703
        %v705 = vsel %vm596, %v670, 0.0
        %706 = vadd.xlane.f32.xlu0 %v705
        %v707 = vpop.xlane.xlu0 %706
        %v708 = vsel %vm596, %v672, 0.0
        %709 = vadd.xlane.f32.xlu0 %v708
        %v710 = vpop.xlane.xlu0 %709
        %v711 = vsel %vm596, %v674, 0.0
        %712 = vadd.xlane.f32.xlu0 %v711
        %v713 = vpop.xlane.xlu0 %712
        %v714 = vsel %vm596, %v676, 0.0
        %715 = vadd.xlane.f32.xlu0 %v714
        %v716 = vpop.xlane.xlu0 %715
        %v717 = vsel %vm596, %v678, 0.0
        %718 = vadd.xlane.f32.xlu0 %v717
        %v719 = vpop.xlane.xlu0 %718
        %v720 = vsel %vm596, %v680, 0.0
        %721 = vadd.xlane.f32.xlu0 %v720
        %v722 = vpop.xlane.xlu0 %721
        %v723 = vsel %vm596, %v682, 0.0
        %724 = vadd.xlane.f32.xlu0 %v723
        %v725 = vpop.xlane.xlu0 %724
        %v726 = vsel %vm596, %v684, 0.0
        %727 = vadd.xlane.f32.xlu0 %v726
        %v728 = vpop.xlane.xlu0 %727
        %v729 = vsel %vm596, %v686, 0.0
        %730 = vadd.xlane.f32.xlu0 %v729
        %v731 = vpop.xlane.xlu0 %730
        %v732 = vsel %vm596, %v688, 0.0
        %733 = vadd.xlane.f32.xlu0 %v732
        %v734 = vpop.xlane.xlu0 %733
        %v735 = vsel %vm596, %v690, 0.0
        %736 = vadd.xlane.f32.xlu0 %v735
        %v737 = vpop.xlane.xlu0 %736
        %v738 = vsel %vm596, %v692, 0.0
        %739 = vadd.xlane.f32.xlu0 %v738
        %v740 = vpop.xlane.xlu0 %739
        %v742 = vsel %vm596, %v662, 0
        %744 = vmatpush.msra.mxu0 0.0
        %745 = vmatpush.msra.mxu0 0.0
        %746 = vmatpush.msra.mxu0 0.0
        %747 = vmatpush.msra.mxu0 0.0
        %748 = vmatpush.msra.mxu0 0.0
        %749 = vmatpush.msra.mxu0 0.0
        %750 = vmatpush.msra.mxu0 0.0
        %751 = vmatpush.msra.mxu0 0.0
        %752 = vmatpush.msra.mxu0 0.0
        %753 = vmatpush.msra.mxu0 0.0
        %754 = vmatpush.msra.mxu0 0.0
        %755 = vmatpush.msra.mxu0 0.0
        %756 = vmatpush.msra.mxu0 0.0
        %757 = vmatpush.msra.mxu0 0.0
        %758 = vmatpush.msra.mxu0 0.0
        %759 = vmatpush.msra.mxu0 %v147
        %760 = vmatmul.f32.gmra.mxu0 %v742
        %v761 = vpop.f32.mrf.mxu0
        %v762 = vadd.f32 0.0, %v761
        %763 = vdwg.mxu0
        %v765 = vsel %vm596, %v664, 0
        %767 = vmatpush.msra.mxu0 0.0
        %768 = vmatpush.msra.mxu0 0.0
        %769 = vmatpush.msra.mxu0 0.0
        %770 = vmatpush.msra.mxu0 0.0
        %771 = vmatpush.msra.mxu0 0.0
        %772 = vmatpush.msra.mxu0 0.0
        %773 = vmatpush.msra.mxu0 0.0
        %774 = vmatpush.msra.mxu0 0.0
        %775 = vmatpush.msra.mxu0 0.0
        %776 = vmatpush.msra.mxu0 0.0
        %777 = vmatpush.msra.mxu0 0.0
        %778 = vmatpush.msra.mxu0 0.0
        %779 = vmatpush.msra.mxu0 0.0
        %780 = vmatpush.msra.mxu0 0.0
        %781 = vmatpush.msra.mxu0 0.0
        %782 = vmatpush.msra.mxu0 %v148
        %783 = vmatmul.f32.gmra.mxu0 %v765
        %v784 = vpop.f32.mrf.mxu0
        %v785 = vadd.f32 0.0, %v784
        %786 = vdwg.mxu0
        %v788 = vsel %vm596, %v666, 0
        %790 = vmatpush.msra.mxu0 0.0
        %791 = vmatpush.msra.mxu0 0.0
        %792 = vmatpush.msra.mxu0 0.0
        %793 = vmatpush.msra.mxu0 0.0
        %794 = vmatpush.msra.mxu0 0.0
        %795 = vmatpush.msra.mxu0 0.0
        %796 = vmatpush.msra.mxu0 0.0
        %797 = vmatpush.msra.mxu0 0.0
        %798 = vmatpush.msra.mxu0 0.0
        %799 = vmatpush.msra.mxu0 0.0
        %800 = vmatpush.msra.mxu0 0.0
        %801 = vmatpush.msra.mxu0 0.0
        %802 = vmatpush.msra.mxu0 0.0
        %803 = vmatpush.msra.mxu0 0.0
        %804 = vmatpush.msra.mxu0 0.0
        %805 = vmatpush.msra.mxu0 %v149
        %806 = vmatmul.f32.gmra.mxu0 %v788
        %v807 = vpop.f32.mrf.mxu0
        %v808 = vadd.f32 0.0, %v807
        %809 = vdwg.mxu0
        %v811 = vsel %vm596, %v668, 0
        %813 = vmatpush.msra.mxu0 0.0
        %814 = vmatpush.msra.mxu0 0.0
        %815 = vmatpush.msra.mxu0 0.0
        %816 = vmatpush.msra.mxu0 0.0
        %817 = vmatpush.msra.mxu0 0.0
        %818 = vmatpush.msra.mxu0 0.0
        %819 = vmatpush.msra.mxu0 0.0
        %820 = vmatpush.msra.mxu0 0.0
        %821 = vmatpush.msra.mxu0 0.0
        %822 = vmatpush.msra.mxu0 0.0
        %823 = vmatpush.msra.mxu0 0.0
        %824 = vmatpush.msra.mxu0 0.0
        %825 = vmatpush.msra.mxu0 0.0
        %826 = vmatpush.msra.mxu0 0.0
        %827 = vmatpush.msra.mxu0 0.0
        %828 = vmatpush.msra.mxu0 %v150
        %829 = vmatmul.f32.gmra.mxu0 %v811
        %v830 = vpop.f32.mrf.mxu0
        %v831 = vadd.f32 0.0, %v830
        %832 = vdwg.mxu0
        %v834 = vsel %vm596, %v670, 0
        %836 = vmatpush.msra.mxu0 0.0
        %837 = vmatpush.msra.mxu0 0.0
        %838 = vmatpush.msra.mxu0 0.0
        %839 = vmatpush.msra.mxu0 0.0
        %840 = vmatpush.msra.mxu0 0.0
        %841 = vmatpush.msra.mxu0 0.0
        %842 = vmatpush.msra.mxu0 0.0
        %843 = vmatpush.msra.mxu0 0.0
        %844 = vmatpush.msra.mxu0 0.0
        %845 = vmatpush.msra.mxu0 0.0
        %846 = vmatpush.msra.mxu0 0.0
        %847 = vmatpush.msra.mxu0 0.0
        %848 = vmatpush.msra.mxu0 0.0
        %849 = vmatpush.msra.mxu0 0.0
        %850 = vmatpush.msra.mxu0 0.0
        %851 = vmatpush.msra.mxu0 %v151
        %852 = vmatmul.f32.gmra.mxu0 %v834
        %v853 = vpop.f32.mrf.mxu0
        %v854 = vadd.f32 0.0, %v853
        %855 = vdwg.mxu0
        %v857 = vsel %vm596, %v672, 0
        %859 = vmatpush.msra.mxu0 0.0
        %860 = vmatpush.msra.mxu0 0.0
        %861 = vmatpush.msra.mxu0 0.0
        %862 = vmatpush.msra.mxu0 0.0
        %863 = vmatpush.msra.mxu0 0.0
        %864 = vmatpush.msra.mxu0 0.0
        %865 = vmatpush.msra.mxu0 0.0
        %866 = vmatpush.msra.mxu0 0.0
        %867 = vmatpush.msra.mxu0 0.0
        %868 = vmatpush.msra.mxu0 0.0
        %869 = vmatpush.msra.mxu0 0.0
        %870 = vmatpush.msra.mxu0 0.0
        %871 = vmatpush.msra.mxu0 0.0
        %872 = vmatpush.msra.mxu0 0.0
        %873 = vmatpush.msra.mxu0 0.0
        %874 = vmatpush.msra.mxu0 %v152
        %875 = vmatmul.f32.gmra.mxu0 %v857
        %v876 = vpop.f32.mrf.mxu0
        %v877 = vadd.f32 0.0, %v876
        %878 = vdwg.mxu0
        %v880 = vsel %vm596, %v674, 0
        %882 = vmatpush.msra.mxu0 0.0
        %883 = vmatpush.msra.mxu0 0.0
        %884 = vmatpush.msra.mxu0 0.0
        %885 = vmatpush.msra.mxu0 0.0
        %886 = vmatpush.msra.mxu0 0.0
        %887 = vmatpush.msra.mxu0 0.0
        %888 = vmatpush.msra.mxu0 0.0
        %889 = vmatpush.msra.mxu0 0.0
        %890 = vmatpush.msra.mxu0 0.0
        %891 = vmatpush.msra.mxu0 0.0
        %892 = vmatpush.msra.mxu0 0.0
        %893 = vmatpush.msra.mxu0 0.0
        %894 = vmatpush.msra.mxu0 0.0
        %895 = vmatpush.msra.mxu0 0.0
        %896 = vmatpush.msra.mxu0 0.0
        %897 = vmatpush.msra.mxu0 %v153
        %898 = vmatmul.f32.gmra.mxu0 %v880
        %v899 = vpop.f32.mrf.mxu0
        %v900 = vadd.f32 0.0, %v899
        %901 = vdwg.mxu0
        %v903 = vsel %vm596, %v676, 0
        %905 = vmatpush.msra.mxu0 0.0
        %906 = vmatpush.msra.mxu0 0.0
        %907 = vmatpush.msra.mxu0 0.0
        %908 = vmatpush.msra.mxu0 0.0
        %909 = vmatpush.msra.mxu0 0.0
        %910 = vmatpush.msra.mxu0 0.0
        %911 = vmatpush.msra.mxu0 0.0
        %912 = vmatpush.msra.mxu0 0.0
        %913 = vmatpush.msra.mxu0 0.0
        %914 = vmatpush.msra.mxu0 0.0
        %915 = vmatpush.msra.mxu0 0.0
        %916 = vmatpush.msra.mxu0 0.0
        %917 = vmatpush.msra.mxu0 0.0
        %918 = vmatpush.msra.mxu0 0.0
        %919 = vmatpush.msra.mxu0 0.0
        %920 = vmatpush.msra.mxu0 %v154
        %921 = vmatmul.f32.gmra.mxu0 %v903
        %v922 = vpop.f32.mrf.mxu0
        %v923 = vadd.f32 0.0, %v922
        %924 = vdwg.mxu0
        %v926 = vsel %vm596, %v678, 0
        %928 = vmatpush.msra.mxu0 0.0
        %929 = vmatpush.msra.mxu0 0.0
        %930 = vmatpush.msra.mxu0 0.0
        %931 = vmatpush.msra.mxu0 0.0
        %932 = vmatpush.msra.mxu0 0.0
        %933 = vmatpush.msra.mxu0 0.0
        %934 = vmatpush.msra.mxu0 0.0
        %935 = vmatpush.msra.mxu0 0.0
        %936 = vmatpush.msra.mxu0 0.0
        %937 = vmatpush.msra.mxu0 0.0
        %938 = vmatpush.msra.mxu0 0.0
        %939 = vmatpush.msra.mxu0 0.0
        %940 = vmatpush.msra.mxu0 0.0
        %941 = vmatpush.msra.mxu0 0.0
        %942 = vmatpush.msra.mxu0 0.0
        %943 = vmatpush.msra.mxu0 %v155
        %944 = vmatmul.f32.gmra.mxu0 %v926
        %v945 = vpop.f32.mrf.mxu0
        %v946 = vadd.f32 0.0, %v945
        %947 = vdwg.mxu0
        %v949 = vsel %vm596, %v680, 0
        %951 = vmatpush.msra.mxu0 0.0
        %952 = vmatpush.msra.mxu0 0.0
        %953 = vmatpush.msra.mxu0 0.0
        %954 = vmatpush.msra.mxu0 0.0
        %955 = vmatpush.msra.mxu0 0.0
        %956 = vmatpush.msra.mxu0 0.0
        %957 = vmatpush.msra.mxu0 0.0
        %958 = vmatpush.msra.mxu0 0.0
        %959 = vmatpush.msra.mxu0 0.0
        %960 = vmatpush.msra.mxu0 0.0
        %961 = vmatpush.msra.mxu0 0.0
        %962 = vmatpush.msra.mxu0 0.0
        %963 = vmatpush.msra.mxu0 0.0
        %964 = vmatpush.msra.mxu0 0.0
        %965 = vmatpush.msra.mxu0 0.0
        %966 = vmatpush.msra.mxu0 %v156
        %967 = vmatmul.f32.gmra.mxu0 %v949
        %v968 = vpop.f32.mrf.mxu0
        %v969 = vadd.f32 0.0, %v968
        %970 = vdwg.mxu0
        %v972 = vsel %vm596, %v682, 0
        %974 = vmatpush.msra.mxu0 0.0
        %975 = vmatpush.msra.mxu0 0.0
        %976 = vmatpush.msra.mxu0 0.0
        %977 = vmatpush.msra.mxu0 0.0
        %978 = vmatpush.msra.mxu0 0.0
        %979 = vmatpush.msra.mxu0 0.0
        %980 = vmatpush.msra.mxu0 0.0
        %981 = vmatpush.msra.mxu0 0.0
        %982 = vmatpush.msra.mxu0 0.0
        %983 = vmatpush.msra.mxu0 0.0
        %984 = vmatpush.msra.mxu0 0.0
        %985 = vmatpush.msra.mxu0 0.0
        %986 = vmatpush.msra.mxu0 0.0
        %987 = vmatpush.msra.mxu0 0.0
        %988 = vmatpush.msra.mxu0 0.0
        %989 = vmatpush.msra.mxu0 %v157
        %990 = vmatmul.f32.gmra.mxu0 %v972
        %v991 = vpop.f32.mrf.mxu0
        %v992 = vadd.f32 0.0, %v991
        %993 = vdwg.mxu0
        %v995 = vsel %vm596, %v684, 0
        %997 = vmatpush.msra.mxu0 0.0
        %998 = vmatpush.msra.mxu0 0.0
        %999 = vmatpush.msra.mxu0 0.0
        %1000 = vmatpush.msra.mxu0 0.0
        %1001 = vmatpush.msra.mxu0 0.0
        %1002 = vmatpush.msra.mxu0 0.0
        %1003 = vmatpush.msra.mxu0 0.0
        %1004 = vmatpush.msra.mxu0 0.0
        %1005 = vmatpush.msra.mxu0 0.0
        %1006 = vmatpush.msra.mxu0 0.0
        %1007 = vmatpush.msra.mxu0 0.0
        %1008 = vmatpush.msra.mxu0 0.0
        %1009 = vmatpush.msra.mxu0 0.0
        %1010 = vmatpush.msra.mxu0 0.0
        %1011 = vmatpush.msra.mxu0 0.0
        %1012 = vmatpush.msra.mxu0 %v158
        %1013 = vmatmul.f32.gmra.mxu0 %v995
        %v1014 = vpop.f32.mrf.mxu0
        %v1015 = vadd.f32 0.0, %v1014
        %1016 = vdwg.mxu0
        %v1018 = vsel %vm596, %v686, 0
        %1020 = vmatpush.msra.mxu0 0.0
        %1021 = vmatpush.msra.mxu0 0.0
        %1022 = vmatpush.msra.mxu0 0.0
        %1023 = vmatpush.msra.mxu0 0.0
        %1024 = vmatpush.msra.mxu0 0.0
        %1025 = vmatpush.msra.mxu0 0.0
        %1026 = vmatpush.msra.mxu0 0.0
        %1027 = vmatpush.msra.mxu0 0.0
        %1028 = vmatpush.msra.mxu0 0.0
        %1029 = vmatpush.msra.mxu0 0.0
        %1030 = vmatpush.msra.mxu0 0.0
        %1031 = vmatpush.msra.mxu0 0.0
        %1032 = vmatpush.msra.mxu0 0.0
        %1033 = vmatpush.msra.mxu0 0.0
        %1034 = vmatpush.msra.mxu0 0.0
        %1035 = vmatpush.msra.mxu0 %v159
        %1036 = vmatmul.f32.gmra.mxu0 %v1018
        %v1037 = vpop.f32.mrf.mxu0
        %v1038 = vadd.f32 0.0, %v1037
        %1039 = vdwg.mxu0
        %v1041 = vsel %vm596, %v688, 0
        %1043 = vmatpush.msra.mxu0 0.0
        %1044 = vmatpush.msra.mxu0 0.0
        %1045 = vmatpush.msra.mxu0 0.0
        %1046 = vmatpush.msra.mxu0 0.0
        %1047 = vmatpush.msra.mxu0 0.0
        %1048 = vmatpush.msra.mxu0 0.0
        %1049 = vmatpush.msra.mxu0 0.0
        %1050 = vmatpush.msra.mxu0 0.0
        %1051 = vmatpush.msra.mxu0 0.0
        %1052 = vmatpush.msra.mxu0 0.0
        %1053 = vmatpush.msra.mxu0 0.0
        %1054 = vmatpush.msra.mxu0 0.0
        %1055 = vmatpush.msra.mxu0 0.0
        %1056 = vmatpush.msra.mxu0 0.0
        %1057 = vmatpush.msra.mxu0 0.0
        %1058 = vmatpush.msra.mxu0 %v160
        %1059 = vmatmul.f32.gmra.mxu0 %v1041
        %v1060 = vpop.f32.mrf.mxu0
        %v1061 = vadd.f32 0.0, %v1060
        %1062 = vdwg.mxu0
        %v1064 = vsel %vm596, %v690, 0
        %1066 = vmatpush.msra.mxu0 0.0
        %1067 = vmatpush.msra.mxu0 0.0
        %1068 = vmatpush.msra.mxu0 0.0
        %1069 = vmatpush.msra.mxu0 0.0
        %1070 = vmatpush.msra.mxu0 0.0
        %1071 = vmatpush.msra.mxu0 0.0
        %1072 = vmatpush.msra.mxu0 0.0
        %1073 = vmatpush.msra.mxu0 0.0
        %1074 = vmatpush.msra.mxu0 0.0
        %1075 = vmatpush.msra.mxu0 0.0
        %1076 = vmatpush.msra.mxu0 0.0
        %1077 = vmatpush.msra.mxu0 0.0
        %1078 = vmatpush.msra.mxu0 0.0
        %1079 = vmatpush.msra.mxu0 0.0
        %1080 = vmatpush.msra.mxu0 0.0
        %1081 = vmatpush.msra.mxu0 %v161
        %1082 = vmatmul.f32.gmra.mxu0 %v1064
        %v1083 = vpop.f32.mrf.mxu0
        %v1084 = vadd.f32 0.0, %v1083
        %1085 = vdwg.mxu0
        %v1087 = vsel %vm596, %v692, 0
        %1089 = vmatpush.msra.mxu0 0.0
        %1090 = vmatpush.msra.mxu0 0.0
        %1091 = vmatpush.msra.mxu0 0.0
        %1092 = vmatpush.msra.mxu0 0.0
        %1093 = vmatpush.msra.mxu0 0.0
        %1094 = vmatpush.msra.mxu0 0.0
        %1095 = vmatpush.msra.mxu0 0.0
        %1096 = vmatpush.msra.mxu0 0.0
        %1097 = vmatpush.msra.mxu0 0.0
        %1098 = vmatpush.msra.mxu0 0.0
        %1099 = vmatpush.msra.mxu0 0.0
        %1100 = vmatpush.msra.mxu0 0.0
        %1101 = vmatpush.msra.mxu0 0.0
        %1102 = vmatpush.msra.mxu0 0.0
        %1103 = vmatpush.msra.mxu0 0.0
        %1104 = vmatpush.msra.mxu0 %v162
        %1105 = vmatmul.f32.gmra.mxu0 %v1087
        %v1106 = vpop.f32.mrf.mxu0
        %v1107 = vadd.f32 0.0, %v1106
        %1108 = vdwg.mxu0
        %v1109 = vrcp.pop %v695
        %v1110 = vmul.f32 %v695, %v1109
        %v1111 = vsub.f32 1.0, %v1110
        %v1112 = vmul.f32 %v1109, %v1111
        %v1113 = vadd.f32 %v1109, %v1112
        %vm1114 = vweird.f32 %v695
        %vm1115 = vweird.f32 %v1109
        %vm1116 = vmor %vm1114, %vm1115
        %v1117 = vsel %vm1116, %v1109, %v1113
        %v1118 = vand.u32 2147483647, %v695
        %vm1119 = vcmp.eq.f32.partialorder %v1118, 8.507059e+37
        %v1120 = vand.u32 %v695, 2147483648
        %v1121 = vor.u32 1.1754944e-38, %v1120
        %v1122 = vsel %vm1119, %v1121, %v1117
        %v1123 = vmul.f32 %v762, %v1122
        %v1124 = vrcp.pop %v698
        %v1125 = vmul.f32 %v698, %v1124
        %v1126 = vsub.f32 1.0, %v1125
        %v1127 = vmul.f32 %v1124, %v1126
        %v1128 = vadd.f32 %v1124, %v1127
        %vm1129 = vweird.f32 %v698
        %vm1130 = vweird.f32 %v1124
        %vm1131 = vmor %vm1129, %vm1130
        %v1132 = vsel %vm1131, %v1124, %v1128
        %v1133 = vand.u32 2147483647, %v698
        %vm1134 = vcmp.eq.f32.partialorder %v1133, 8.507059e+37
        %v1135 = vand.u32 %v698, 2147483648
        %v1136 = vor.u32 1.1754944e-38, %v1135
        %v1137 = vsel %vm1134, %v1136, %v1132
        %v1138 = vmul.f32 %v785, %v1137
        %v1139 = vrcp.pop %v701
        %v1140 = vmul.f32 %v701, %v1139
        %v1141 = vsub.f32 1.0, %v1140
        %v1142 = vmul.f32 %v1139, %v1141
        %v1143 = vadd.f32 %v1139, %v1142
        %vm1144 = vweird.f32 %v701
        %vm1145 = vweird.f32 %v1139
        %vm1146 = vmor %vm1144, %vm1145
        %v1147 = vsel %vm1146, %v1139, %v1143
        %v1148 = vand.u32 2147483647, %v701
        %vm1149 = vcmp.eq.f32.partialorder %v1148, 8.507059e+37
        %v1150 = vand.u32 %v701, 2147483648
        %v1151 = vor.u32 1.1754944e-38, %v1150
        %v1152 = vsel %vm1149, %v1151, %v1147
        %v1153 = vmul.f32 %v808, %v1152
        %v1154 = vrcp.pop %v704
        %v1155 = vmul.f32 %v704, %v1154
        %v1156 = vsub.f32 1.0, %v1155
        %v1157 = vmul.f32 %v1154, %v1156
        %v1158 = vadd.f32 %v1154, %v1157
        %vm1159 = vweird.f32 %v704
        %vm1160 = vweird.f32 %v1154
        %vm1161 = vmor %vm1159, %vm1160
        %v1162 = vsel %vm1161, %v1154, %v1158
        %v1163 = vand.u32 2147483647, %v704
        %vm1164 = vcmp.eq.f32.partialorder %v1163, 8.507059e+37
        %v1165 = vand.u32 %v704, 2147483648
        %v1166 = vor.u32 1.1754944e-38, %v1165
        %v1167 = vsel %vm1164, %v1166, %v1162
        %v1168 = vmul.f32 %v831, %v1167
        %v1169 = vrcp.pop %v707
        %v1170 = vmul.f32 %v707, %v1169
        %v1171 = vsub.f32 1.0, %v1170
        %v1172 = vmul.f32 %v1169, %v1171
        %v1173 = vadd.f32 %v1169, %v1172
        %vm1174 = vweird.f32 %v707
        %vm1175 = vweird.f32 %v1169
        %vm1176 = vmor %vm1174, %vm1175
        %v1177 = vsel %vm1176, %v1169, %v1173
        %v1178 = vand.u32 2147483647, %v707
        %vm1179 = vcmp.eq.f32.partialorder %v1178, 8.507059e+37
        %v1180 = vand.u32 %v707, 2147483648
        %v1181 = vor.u32 1.1754944e-38, %v1180
        %v1182 = vsel %vm1179, %v1181, %v1177
        %v1183 = vmul.f32 %v854, %v1182
        %v1184 = vrcp.pop %v710
        %v1185 = vmul.f32 %v710, %v1184
        %v1186 = vsub.f32 1.0, %v1185
        %v1187 = vmul.f32 %v1184, %v1186
        %v1188 = vadd.f32 %v1184, %v1187
        %vm1189 = vweird.f32 %v710
        %vm1190 = vweird.f32 %v1184
        %vm1191 = vmor %vm1189, %vm1190
        %v1192 = vsel %vm1191, %v1184, %v1188
        %v1193 = vand.u32 2147483647, %v710
        %vm1194 = vcmp.eq.f32.partialorder %v1193, 8.507059e+37
        %v1195 = vand.u32 %v710, 2147483648
        %v1196 = vor.u32 1.1754944e-38, %v1195
        %v1197 = vsel %vm1194, %v1196, %v1192
        %v1198 = vmul.f32 %v877, %v1197
        %v1199 = vrcp.pop %v713
        %v1200 = vmul.f32 %v713, %v1199
        %v1201 = vsub.f32 1.0, %v1200
        %v1202 = vmul.f32 %v1199, %v1201
        %v1203 = vadd.f32 %v1199, %v1202
        %vm1204 = vweird.f32 %v713
        %vm1205 = vweird.f32 %v1199
        %vm1206 = vmor %vm1204, %vm1205
        %v1207 = vsel %vm1206, %v1199, %v1203
        %v1208 = vand.u32 2147483647, %v713
        %vm1209 = vcmp.eq.f32.partialorder %v1208, 8.507059e+37
        %v1210 = vand.u32 %v713, 2147483648
        %v1211 = vor.u32 1.1754944e-38, %v1210
        %v1212 = vsel %vm1209, %v1211, %v1207
        %v1213 = vmul.f32 %v900, %v1212
        %v1214 = vrcp.pop %v716
        %v1215 = vmul.f32 %v716, %v1214
        %v1216 = vsub.f32 1.0, %v1215
        %v1217 = vmul.f32 %v1214, %v1216
        %v1218 = vadd.f32 %v1214, %v1217
        %vm1219 = vweird.f32 %v716
        %vm1220 = vweird.f32 %v1214
        %vm1221 = vmor %vm1219, %vm1220
        %v1222 = vsel %vm1221, %v1214, %v1218
        %v1223 = vand.u32 2147483647, %v716
        %vm1224 = vcmp.eq.f32.partialorder %v1223, 8.507059e+37
        %v1225 = vand.u32 %v716, 2147483648
        %v1226 = vor.u32 1.1754944e-38, %v1225
        %v1227 = vsel %vm1224, %v1226, %v1222
        %v1228 = vmul.f32 %v923, %v1227
        %v1229 = vrcp.pop %v719
        %v1230 = vmul.f32 %v719, %v1229
        %v1231 = vsub.f32 1.0, %v1230
        %v1232 = vmul.f32 %v1229, %v1231
        %v1233 = vadd.f32 %v1229, %v1232
        %vm1234 = vweird.f32 %v719
        %vm1235 = vweird.f32 %v1229
        %vm1236 = vmor %vm1234, %vm1235
        %v1237 = vsel %vm1236, %v1229, %v1233
        %v1238 = vand.u32 2147483647, %v719
        %vm1239 = vcmp.eq.f32.partialorder %v1238, 8.507059e+37
        %v1240 = vand.u32 %v719, 2147483648
        %v1241 = vor.u32 1.1754944e-38, %v1240
        %v1242 = vsel %vm1239, %v1241, %v1237
        %v1243 = vmul.f32 %v946, %v1242
        %v1244 = vrcp.pop %v722
        %v1245 = vmul.f32 %v722, %v1244
        %v1246 = vsub.f32 1.0, %v1245
        %v1247 = vmul.f32 %v1244, %v1246
        %v1248 = vadd.f32 %v1244, %v1247
        %vm1249 = vweird.f32 %v722
        %vm1250 = vweird.f32 %v1244
        %vm1251 = vmor %vm1249, %vm1250
        %v1252 = vsel %vm1251, %v1244, %v1248
        %v1253 = vand.u32 2147483647, %v722
        %vm1254 = vcmp.eq.f32.partialorder %v1253, 8.507059e+37
        %v1255 = vand.u32 %v722, 2147483648
        %v1256 = vor.u32 1.1754944e-38, %v1255
        %v1257 = vsel %vm1254, %v1256, %v1252
        %v1258 = vmul.f32 %v969, %v1257
        %v1259 = vrcp.pop %v725
        %v1260 = vmul.f32 %v725, %v1259
        %v1261 = vsub.f32 1.0, %v1260
        %v1262 = vmul.f32 %v1259, %v1261
        %v1263 = vadd.f32 %v1259, %v1262
        %vm1264 = vweird.f32 %v725
        %vm1265 = vweird.f32 %v1259
        %vm1266 = vmor %vm1264, %vm1265
        %v1267 = vsel %vm1266, %v1259, %v1263
        %v1268 = vand.u32 2147483647, %v725
        %vm1269 = vcmp.eq.f32.partialorder %v1268, 8.507059e+37
        %v1270 = vand.u32 %v725, 2147483648
        %v1271 = vor.u32 1.1754944e-38, %v1270
        %v1272 = vsel %vm1269, %v1271, %v1267
        %v1273 = vmul.f32 %v992, %v1272
        %v1274 = vrcp.pop %v728
        %v1275 = vmul.f32 %v728, %v1274
        %v1276 = vsub.f32 1.0, %v1275
        %v1277 = vmul.f32 %v1274, %v1276
        %v1278 = vadd.f32 %v1274, %v1277
        %vm1279 = vweird.f32 %v728
        %vm1280 = vweird.f32 %v1274
        %vm1281 = vmor %vm1279, %vm1280
        %v1282 = vsel %vm1281, %v1274, %v1278
        %v1283 = vand.u32 2147483647, %v728
        %vm1284 = vcmp.eq.f32.partialorder %v1283, 8.507059e+37
        %v1285 = vand.u32 %v728, 2147483648
        %v1286 = vor.u32 1.1754944e-38, %v1285
        %v1287 = vsel %vm1284, %v1286, %v1282
        %v1288 = vmul.f32 %v1015, %v1287
        %v1289 = vrcp.pop %v731
        %v1290 = vmul.f32 %v731, %v1289
        %v1291 = vsub.f32 1.0, %v1290
        %v1292 = vmul.f32 %v1289, %v1291
        %v1293 = vadd.f32 %v1289, %v1292
        %vm1294 = vweird.f32 %v731
        %vm1295 = vweird.f32 %v1289
        %vm1296 = vmor %vm1294, %vm1295
        %v1297 = vsel %vm1296, %v1289, %v1293
        %v1298 = vand.u32 2147483647, %v731
        %vm1299 = vcmp.eq.f32.partialorder %v1298, 8.507059e+37
        %v1300 = vand.u32 %v731, 2147483648
        %v1301 = vor.u32 1.1754944e-38, %v1300
        %v1302 = vsel %vm1299, %v1301, %v1297
        %v1303 = vmul.f32 %v1038, %v1302
        %v1304 = vrcp.pop %v734
        %v1305 = vmul.f32 %v734, %v1304
        %v1306 = vsub.f32 1.0, %v1305
        %v1307 = vmul.f32 %v1304, %v1306
        %v1308 = vadd.f32 %v1304, %v1307
        %vm1309 = vweird.f32 %v734
        %vm1310 = vweird.f32 %v1304
        %vm1311 = vmor %vm1309, %vm1310
        %v1312 = vsel %vm1311, %v1304, %v1308
        %v1313 = vand.u32 2147483647, %v734
        %vm1314 = vcmp.eq.f32.partialorder %v1313, 8.507059e+37
        %v1315 = vand.u32 %v734, 2147483648
        %v1316 = vor.u32 1.1754944e-38, %v1315
        %v1317 = vsel %vm1314, %v1316, %v1312
        %v1318 = vmul.f32 %v1061, %v1317
        %v1319 = vrcp.pop %v737
        %v1320 = vmul.f32 %v737, %v1319
        %v1321 = vsub.f32 1.0, %v1320
        %v1322 = vmul.f32 %v1319, %v1321
        %v1323 = vadd.f32 %v1319, %v1322
        %vm1324 = vweird.f32 %v737
        %vm1325 = vweird.f32 %v1319
        %vm1326 = vmor %vm1324, %vm1325
        %v1327 = vsel %vm1326, %v1319, %v1323
        %v1328 = vand.u32 2147483647, %v737
        %vm1329 = vcmp.eq.f32.partialorder %v1328, 8.507059e+37
        %v1330 = vand.u32 %v737, 2147483648
        %v1331 = vor.u32 1.1754944e-38, %v1330
        %v1332 = vsel %vm1329, %v1331, %v1327
        %v1333 = vmul.f32 %v1084, %v1332
        %v1334 = vrcp.pop %v740
        %v1335 = vmul.f32 %v740, %v1334
        %v1336 = vsub.f32 1.0, %v1335
        %v1337 = vmul.f32 %v1334, %v1336
        %v1338 = vadd.f32 %v1334, %v1337
        %vm1339 = vweird.f32 %v740
        %vm1340 = vweird.f32 %v1334
        %vm1341 = vmor %vm1339, %vm1340
        %v1342 = vsel %vm1341, %v1334, %v1338
        %v1343 = vand.u32 2147483647, %v740
        %vm1344 = vcmp.eq.f32.partialorder %v1343, 8.507059e+37
        %v1345 = vand.u32 %v740, 2147483648
        %v1346 = vor.u32 1.1754944e-38, %v1345
        %v1347 = vsel %vm1344, %v1346, %v1342
        %v1348 = vmul.f32 %v1107, %v1347
        %1349 = vst.msk [vmem:[%s109] sm:$0xff] %vm163, %v1123
        %1350 = vst.msk [vmem:[%s109 + $0x8] sm:$0xff] %vm163, %v1138
        %1351 = vst.msk [vmem:[%s109 + $0x10] sm:$0xff] %vm163, %v1153
        %1352 = vst.msk [vmem:[%s109 + $0x18] sm:$0xff] %vm163, %v1168
        %1353 = vst.msk [vmem:[%s109 + $0x20] sm:$0xff] %vm163, %v1183
        %1354 = vst.msk [vmem:[%s109 + $0x28] sm:$0xff] %vm163, %v1198
        %1355 = vst.msk [vmem:[%s109 + $0x30] sm:$0xff] %vm163, %v1213
        %1356 = vst.msk [vmem:[%s109 + $0x38] sm:$0xff] %vm163, %v1228
        %1357 = vst.msk [vmem:[%s109 + $0x40] sm:$0xff] %vm163, %v1243
        %1358 = vst.msk [vmem:[%s109 + $0x48] sm:$0xff] %vm163, %v1258
        %1359 = vst.msk [vmem:[%s109 + $0x50] sm:$0xff] %vm163, %v1273
        %1360 = vst.msk [vmem:[%s109 + $0x58] sm:$0xff] %vm163, %v1288
        %1361 = vst.msk [vmem:[%s109 + $0x60] sm:$0xff] %vm163, %v1303
        %1362 = vst.msk [vmem:[%s109 + $0x68] sm:$0xff] %vm163, %v1318
        %1363 = vst.msk [vmem:[%s109 + $0x70] sm:$0xff] %vm163, %v1333
        %1364 = vst.msk [vmem:[%s109 + $0x78] sm:$0xff] %vm163, %v1348
        %s1365 = sand.u32 %s49, 1
        %s1366 = scalar_lea.sflag [#allocation3], %s1365
        %s1367 = sand.u32 %s49, 1
        %s1368 = smul.addr %s1367, 128
        %s1369 = scalar_lea.vmem [#allocation2], %s1368
        // Predicated region
        $region25: #{temporal_attention.3} parent=23 // pred_check
          %p1370 = pneg %p59
        $region26: #{temporal_attention.3} parent=23 // pred_check_branch
          %1372 = sbr.rel (%p1370) target = $region28
        $region27: #{temporal_attention.3} parent=23 // pred_region
          %1374 = vsyncadd %s1366, 0
          %s1375 = smul.addr %s15, 16
          %s1376 = smul.addr %s1375, 8
          %s1377 = scalar_lea.hbm %s1, %s1376
          %s1378 = sshll.u32 %s1369, 4
          %s1379 = int_to_ptr.vmem [resolvable:$true] %s1378
          %s1380 = sshll.u32 %s1377, 4
          %s1381 = int_to_ptr.hbm [resolvable:$true] %s1380
          %1386 = dma.vmem_to_hbm [thread:$0]  %s1379, 2048, %s1381, %s1366, 128, 128, 8
        $region28: #{temporal_attention.3} parent=23 // pred_fallthru
          _
      $region24: #{temporal_attention.3} parent=5 // pred_fallthru
        _
      %p1387 = scmp.le.s32.totalorder 2, %s10
      // Predicated region
      $region29: #{temporal_attention.3} parent=5 // pred_check
        %p1388 = pneg %p1387
      $region30: #{temporal_attention.3} parent=5 // pred_check_branch
        %1390 = sbr.rel (%p1388) target = $region32
      $region31: #{temporal_attention.3} parent=5 // pred_region
        %s1391 = ssub.s32 %s10, 2
        // Predicated region
        $region33: #{temporal_attention.3} parent=31 // pred_check
          %p1392 = pneg %p65
        $region34: #{temporal_attention.3} parent=31 // pred_check_branch
          %1394 = sbr.rel (%p1392) target = $region36
        $region35: #{temporal_attention.3} parent=31 // pred_region
          %s1395 = sand.u32 %s50, 1
          %s1396 = scalar_lea.sflag [#allocation3], %s1395
          %s1397 = sand.u32 %s50, 1
          %s1398 = smul.addr %s1397, 128
          %s1399 = scalar_lea.vmem [#allocation2], %s1398
          %1401 = dma.done %s1396, 2048
        $region36: #{temporal_attention.3} parent=31 // pred_fallthru
          _
      $region32: #{temporal_attention.3} parent=5 // pred_fallthru
        _
    $region6: #{temporal_attention.3} parent=1 // loop_footer
      %s14 = sadd.s32 1, %s10
    $region7: #{temporal_attention.3} parent=1 // loop_footer_branch
      %9 = sbr.rel target = $region3
    $region8: #{temporal_attention.3} parent=1 // loop_exit
      _
    %1402 = vsyncpa [#allocation3], 1
    %s1403 = scalar_lea.sflag [#allocation3], 1
    %1404 = vsyncpa %s1403, 1

</llo_original>
